<compile_context>
chip_gen: v7x
topology: tpu7x:2x2x1
jax: 0.10.0
libtpu: 0.0.40
codegen_flags: <defaults>
</compile_context>

<pallas_src>
import math
import functools

import jax
import jax.numpy as jnp
from jax import lax
from jax.experimental import pallas as pl
from jax.experimental.pallas import tpu as pltpu


# ----------------------------------------------------------------------------- helpers

def _layer_norm(x, gamma, beta, eps=1e-5):
    # x: (R, D) f32; gamma/beta: (1, D).  Biased variance, matching torch.nn.LayerNorm.
    m = jnp.mean(x, axis=-1, keepdims=True)
    v = jnp.mean((x - m) ** 2, axis=-1, keepdims=True)
    return (x - m) * lax.rsqrt(v + eps) * gamma + beta


def _vmem_capacity_bytes():
    """Best-effort per-core VMEM capacity; conservative (v7x, 64 MiB) fallback."""
    try:
        info = pltpu.get_tpu_info()
        for attr in ("vmem_capacity_bytes", "vmem_bytes", "vmem_size_bytes"):
            v = getattr(info, attr, None)
            if v:
                return int(v)
    except Exception:
        pass
    return 64 * 1024 * 1024


def _const_spec(shape, index_map, single_buffer):
    """BlockSpec for a grid-constant operand; single-buffer it when supported."""
    if single_buffer:
        try:
            return pl.BlockSpec(shape, index_map, pipeline_mode=pl.Buffered(1))
        except Exception:
            pass
    return pl.BlockSpec(shape, index_map)


def _row_tile(n_rows, cap):
    """Largest multiple-of-8 divisor of n_rows that fits the cap (full if small)."""
    if n_rows <= cap:
        return n_rows
    t = max(8, (cap // 8) * 8)
    while t >= 8:
        if n_rows % t == 0:
            return t
        t -= 8
    return n_rows  # no multiple-of-8 divisor; fall back to a single tile


def _ffn_tiles(n_rows, d_model, f_pad, vmem_limit):
    """Budget-derived (row tile, dim_ff chunk) for the FFN kernel."""
    # Resident (tr, D) working set: x1 in (2x f32) + out (2x f32) + f32 acc + bf16 cache.
    bytes_per_row = 22 * d_model
    tr_cap = max(8, ((vmem_limit // 3) // bytes_per_row) // 8 * 8)
    tr = _row_tile(n_rows, tr_cap)

    fixed = bytes_per_row * tr + 64 * 1024
    avail = max(vmem_limit - fixed, 0)
    # Double-buffered bf16 (D, tf) + (tf, D) weight chunks cost 8 * D * tf bytes.
    tf_cap = max(128, avail // (8 * d_model))
    tf = 128
    t = min((tf_cap // 128) * 128, f_pad)
    while t >= 128:
        if f_pad % t == 0:
            tf = t
            break
        t -= 128
    return tr, tf


# ----------------------------------------------------------------------------- kernels

def _attn_ln1_kernel(x_ref, wqkv_ref, bqkv_ref, wo_ref, c1_ref, x1_ref,
                     qkv_scr, ctx_scr, *, num_heads):
    x = x_ref[0]                                            # (S, D) f32
    S, D = x.shape
    hd = D // num_heads

    # Fused, lane-dense QKV projection (bf16 MXU inputs, f32 accumulation).
    # 1/sqrt(hd) is pre-folded into Wq / bq at pack time.
    qkv = jnp.dot(x.astype(jnp.bfloat16), wqkv_ref[...],
                  preferred_element_type=jnp.float32) + bqkv_ref[...]
    qkv_scr[...] = qkv.astype(jnp.bfloat16)                 # bound the f32 live range

    # TODO(synk): lax.fori_loop over heads (pl.ds slices) for large num_heads / long S,
    #             and flash-style online softmax before targeting long S on v7x.
    for h in range(num_heads):
        lo = h * hd
        qh = qkv_scr[:, lo:lo + hd]                         # (S, hd) bf16
        kh = qkv_scr[:, D + lo:D + lo + hd]
        vh = qkv_scr[:, 2 * D + lo:2 * D + lo + hd]

        # q @ k^T without materializing a transpose (contract the head dims).
        s = lax.dot_general(qh, kh, (((1,), (1,)), ((), ())),
                            preferred_element_type=jnp.float32)       # (S, S) f32
        s = s - jnp.max(s, axis=-1, keepdims=True)
        e = jnp.exp(s)
        p = e * pl.reciprocal(jnp.sum(e, axis=-1, keepdims=True), approx=True)

        oh = lax.dot_general(p.astype(jnp.bfloat16), vh, (((1,), (0,)), ((), ())),
                             preferred_element_type=jnp.float32)      # (S, hd)
        ctx_scr[:, lo:lo + hd] = oh.astype(jnp.bfloat16)

    # Single out-projection with K = D over the concatenated heads (better MXU
    # K-utilization than per-head K = hd folds).
    bo = c1_ref[0:1, :]
    g1 = c1_ref[1:2, :]
    beta1 = c1_ref[2:3, :]
    y = jnp.dot(ctx_scr[...], wo_ref[...], preferred_element_type=jnp.float32) + bo

    # dropout p = 0.0 -> identity; residual + LayerNorm1.
    x1_ref[0] = _layer_norm(x + y, g1, beta1).astype(x1_ref.dtype)


def _ffn_ln2_kernel(x1_ref, w1_ref, b1_ref, w2_ref, c2_ref, o_ref,
                    acc_scr, x1bf_scr):
    f = pl.program_id(1)
    nf = pl.num_programs(1)

    @pl.when(f == 0)
    def _init():
        x1bf_scr[...] = x1_ref[...].astype(jnp.bfloat16)    # cast once per row tile
        acc_scr[...] = jnp.zeros_like(acc_scr)

    # One dim_ff chunk: (tr, D) @ (D, tf) -> ReLU -> (tr, tf) @ (tf, D) accumulated in f32.
    h1 = jnp.dot(x1bf_scr[...], w1_ref[...],
                 preferred_element_type=jnp.float32) + b1_ref[...]
    h1 = jnp.maximum(h1, 0.0).astype(jnp.bfloat16)
    acc_scr[...] += jnp.dot(h1, w2_ref[...], preferred_element_type=jnp.float32)

    @pl.when(f == nf - 1)
    def _finalize():
        b2 = c2_ref[0:1, :]
        g2 = c2_ref[1:2, :]
        beta2 = c2_ref[2:3, :]
        ff = acc_scr[...] + b2
        # dropout p = 0.0 -> identity; residual + LayerNorm2.
        o_ref[...] = _layer_norm(x1_ref[...] + ff, g2, beta2).astype(o_ref.dtype)


# ----------------------------------------------------------------------------- wrapper

def _pack_params(params, num_heads):
    """One-time weight repacking (would happen at load time in a real model)."""
    D = params["wq"].shape[0]
    F = params["w1"].shape[1]
    hd = D // num_heads
    scale = 1.0 / math.sqrt(hd)
    bf16 = jnp.bfloat16

    wqkv = jnp.concatenate(
        [params["wq"] * scale, params["wk"], params["wv"]], axis=1).astype(bf16)
    bqkv = jnp.concatenate(
        [params["bq"] * scale, params["bk"], params["bv"]], axis=1).astype(jnp.float32)
    wo = params["wo"].astype(bf16)
    consts1 = jnp.concatenate(
        [params["bo"], params["ln1_g"], params["ln1_b"]], axis=0).astype(jnp.float32)

    f_pad = ((F + 127) // 128) * 128
    w1, b1, w2 = params["w1"], params["b1"], params["w2"]
    if f_pad != F:  # zero-pad dim_ff: ReLU(0)=0 and padded w2 rows are 0 -> no effect
        w1 = jnp.pad(w1, ((0, 0), (0, f_pad - F)))
        b1 = jnp.pad(b1, ((0, 0), (0, f_pad - F)))
        w2 = jnp.pad(w2, ((0, f_pad - F), (0, 0)))
    consts2 = jnp.concatenate(
        [params["b2"], params["ln2_g"], params["ln2_b"]], axis=0).astype(jnp.float32)

    return dict(wqkv=wqkv, bqkv=bqkv, wo=wo, consts1=consts1,
                w1=w1.astype(bf16), b1=b1.astype(jnp.float32), w2=w2.astype(bf16),
                consts2=consts2, f_pad=f_pad)


def _forward(x, p, num_heads, single_buffer):
    B, S, D = x.shape
    f_pad = p["f_pad"]
    vmem_cap = _vmem_capacity_bytes()
    # ~40 MiB on v7x (64 MiB VMEM), ~80 MiB on v5e/v6e (128 MiB) -> headroom for spills.
    vmem_limit = int(vmem_cap * 0.62)

    # ---- kernel 1: attention + residual + LayerNorm1 (grid over batch) -------------
    attn_flops = B * (8 * S * D * D + 4 * S * S * D)
    attn_bytes = 2 * B * S * D * 4 + (3 * D * D + D * D) * 2 + (3 * D + 3 * D) * 4
    x1 = pl.pallas_call(
        functools.partial(_attn_ln1_kernel, num_heads=num_heads),
        out_shape=jax.ShapeDtypeStruct((B, S, D), jnp.float32),
        grid_spec=pltpu.PrefetchScalarGridSpec(
            num_scalar_prefetch=0,
            grid=(B,),
            in_specs=[
                pl.BlockSpec((1, S, D), lambda b: (b, 0, 0)),                # x
                _const_spec((D, 3 * D), lambda b: (0, 0), single_buffer),    # Wq|Wk|Wv
                _const_spec((1, 3 * D), lambda b: (0, 0), single_buffer),    # bq|bk|bv
                _const_spec((D, D), lambda b: (0, 0), single_buffer),        # Wo
                _const_spec((3, D), lambda b: (0, 0), single_buffer),        # bo|g1|beta1
            ],
            out_specs=pl.BlockSpec((1, S, D), lambda b: (b, 0, 0)),
            scratch_shapes=[
                pltpu.VMEM((S, 3 * D), jnp.bfloat16),   # bf16 qkv cache
                pltpu.VMEM((S, D), jnp.bfloat16),       # concatenated head outputs
            ],
        ),
        compiler_params=pltpu.CompilerParams(
            dimension_semantics=("parallel",),
            vmem_limit_bytes=vmem_limit,
        ),
        cost_estimate=pl.CostEstimate(
            flops=int(attn_flops),
            transcendentals=int(B * num_heads * S * S),
            bytes_accessed=int(attn_bytes),
        ),
    )(x, p["wqkv"], p["bqkv"], p["wo"], p["consts1"])

    # ---- kernel 2: FFN + residual + LayerNorm2 (batch flattened into rows) ----------
    n_rows = B * S
    x1_flat = x1.reshape(n_rows, D)
    tr, tf = _ffn_tiles(n_rows, D, f_pad, vmem_limit)
    nr, nf = n_rows // tr, f_pad // tf

    ffn_flops = 4 * n_rows * D * f_pad
    ffn_bytes = 2 * n_rows * D * 4 + nr * 4 * D * f_pad * 2 + (f_pad + 3 * D) * 4
    out_flat = pl.pallas_call(
        _ffn_ln2_kernel,
        out_shape=jax.ShapeDtypeStruct((n_rows, D), x.dtype),
        grid_spec=pltpu.PrefetchScalarGridSpec(
            num_scalar_prefetch=0,
            grid=(nr, nf),
            in_specs=[
                pl.BlockSpec((tr, D), lambda r, f: (r, 0)),                  # x1 rows
                pl.BlockSpec((D, tf), lambda r, f: (0, f)),                  # W1 chunk
                pl.BlockSpec((1, tf), lambda r, f: (0, f)),                  # b1 chunk
                pl.BlockSpec((tf, D), lambda r, f: (f, 0)),                  # W2 chunk
                _const_spec((3, D), lambda r, f: (0, 0), single_buffer),     # b2|g2|beta2
            ],
            out_specs=pl.BlockSpec((tr, D), lambda r, f: (r, 0)),
            scratch_shapes=[
                pltpu.VMEM((tr, D), jnp.float32),    # FFN accumulator over dim_ff chunks
                pltpu.VMEM((tr, D), jnp.bfloat16),   # bf16 cache of x1 rows
            ],
        ),
        compiler_params=pltpu.CompilerParams(
            dimension_semantics=("parallel", "arbitrary"),
            vmem_limit_bytes=vmem_limit,
        ),
        cost_estimate=pl.CostEstimate(
            flops=int(ffn_flops),
            transcendentals=0,
            bytes_accessed=int(ffn_bytes),
        ),
    )(x1_flat, p["w1"], p["b1"], p["w2"], p["consts2"])

    return out_flat.reshape(B, S, D)


def transformer_block(x, params, num_heads):
    """Forward pass of the post-norm TransformerBlock (mask=None, dropout=0.0)."""
    p = _pack_params(params, num_heads)
    try:
        return _forward(x, p, num_heads, single_buffer=True)
    except Exception:
        # Fallback for JAX versions where pipeline_mode=pl.Buffered(1) is unsupported;
        # identical math, just double-buffered grid-constant weights.
        return _forward(x, p, num_heads, single_buffer=False)


# ----------------------------------------------------------------------------- reference

def reference_block(x, p, num_heads):
    # Pure-JAX f32 reference mirroring nn.MultiheadAttention + post-norm block.
    B, S, D = x.shape
    hd = D // num_heads
    scale = 1.0 / math.sqrt(hd)

    def ln(y, g, b, eps=1e-5):
        m = jnp.mean(y, axis=-1, keepdims=True)
        v = jnp.mean((y - m) ** 2, axis=-1, keepdims=True)
        return (y - m) * lax.rsqrt(v + eps) * g + b

    q = x @ p["wq"] + p["bq"]
    k = x @ p["wk"] + p["bk"]
    v = x @ p["wv"] + p["bv"]
    q = q.reshape(B, S, num_heads, hd).transpose(0, 2, 1, 3)
    k = k.reshape(B, S, num_heads, hd).transpose(0, 2, 1, 3)
    v = v.reshape(B, S, num_heads, hd).transpose(0, 2, 1, 3)
    s = jnp.einsum("bhqd,bhkd->bhqk", q, k) * scale
    a = jax.nn.softmax(s, axis=-1)
    o = jnp.einsum("bhqk,bhkd->bhqd", a, v).transpose(0, 2, 1, 3).reshape(B, S, D)
    o = o @ p["wo"] + p["bo"]
    x1 = ln(x + o, p["ln1_g"], p["ln1_b"])
    ff = jnp.maximum(x1 @ p["w1"] + p["b1"], 0.0) @ p["w2"] + p["b2"]
    return ln(x1 + ff, p["ln2_g"], p["ln2_b"])


def init_params(key, d_model, dim_ff):
    ks = jax.random.split(key, 8)
    s = 0.02
    return {
        # weights stored already transposed so the math is y = x @ W
        "wq": jax.random.normal(ks[0], (d_model, d_model), jnp.float32) * s,
        "wk": jax.random.normal(ks[1], (d_model, d_model), jnp.float32) * s,
        "wv": jax.random.normal(ks[2], (d_model, d_model), jnp.float32) * s,
        "bq": jnp.zeros((1, d_model), jnp.float32),
        "bk": jnp.zeros((1, d_model), jnp.float32),
        "bv": jnp.zeros((1, d_model), jnp.float32),
        "wo": jax.random.normal(ks[3], (d_model, d_model), jnp.float32) * s,
        "bo": jnp.zeros((1, d_model), jnp.float32),
        "ln1_g": jnp.ones((1, d_model), jnp.float32),
        "ln1_b": jnp.zeros((1, d_model), jnp.float32),
        "w1": jax.random.normal(ks[4], (d_model, dim_ff), jnp.float32) * s,
        "b1": jnp.zeros((1, dim_ff), jnp.float32),
        "w2": jax.random.normal(ks[5], (dim_ff, d_model), jnp.float32) * s,
        "b2": jnp.zeros((1, d_model), jnp.float32),
        "ln2_g": jnp.ones((1, d_model), jnp.float32),
        "ln2_b": jnp.zeros((1, d_model), jnp.float32),
    }


if __name__ == "__main__":
    B, S, D, H, F = 2, 8, 32, 4, 64
    key = jax.random.PRNGKey(0)
    kx, kp = jax.random.split(key)
    x = jax.random.normal(kx, (B, S, D), jnp.float32)
    params = init_params(kp, D, F)

    out = transformer_block(x, params, num_heads=H)
    out = jax.block_until_ready(out)

    ref = reference_block(x, params, H)
    assert out.shape == (B, S, D)
    # bf16 MXU inputs + approx softmax reciprocal -> relaxed tolerance vs f32 reference.
    assert jnp.allclose(out, ref, atol=3e-2, rtol=3e-2), "mismatch vs reference"

    print("KERNEL_OK")
</pallas_src>

<mosaic_0001>
module attributes {stable_mosaic.version = 11 : i64} {
  func.func @_attn_ln1_kernel(%arg0: i32, %arg1: memref<1x8x32xf32, #tpu.memory_space<vmem>>, %arg2: memref<32x96xbf16, #tpu.memory_space<vmem>>, %arg3: memref<1x96xf32, #tpu.memory_space<vmem>>, %arg4: memref<32x32xbf16, #tpu.memory_space<vmem>>, %arg5: memref<3x32xf32, #tpu.memory_space<vmem>>, %arg6: memref<1x8x32xf32, #tpu.memory_space<vmem>>, %arg7: memref<8x96xbf16, #tpu.memory_space<vmem>>, %arg8: memref<8x32xbf16, #tpu.memory_space<vmem>>) attributes {dimension_semantics = [#tpu.dimension_semantics<parallel>], iteration_bounds = array<i64: 2>, scalar_prefetch = 0 : i64, scratch_operands = 2 : i64, tpu.core_type = #tpu.core_type<tc>, window_params = [{transform_indices = @transform_0, window_bounds = array<i64: 1, 8, 32>}, {pipeline_mode = #tpu.pipeline_mode<synchronous>, transform_indices = @transform_1, window_bounds = array<i64: 32, 96>}, {pipeline_mode = #tpu.pipeline_mode<synchronous>, transform_indices = @transform_2, window_bounds = array<i64: 1, 96>}, {pipeline_mode = #tpu.pipeline_mode<synchronous>, transform_indices = @transform_3, window_bounds = array<i64: 32, 32>}, {pipeline_mode = #tpu.pipeline_mode<synchronous>, transform_indices = @transform_4, window_bounds = array<i64: 3, 32>}, {transform_indices = @transform_5, window_bounds = array<i64: 1, 8, 32>}]} {
    %c0 = arith.constant 0 : index
    %c0_0 = arith.constant 0 : index
    %c0_1 = arith.constant 0 : index
    %0 = vector.load %arg1[%c0, %c0_0, %c0_1] : memref<1x8x32xf32, #tpu.memory_space<vmem>>, vector<1x8x32xf32>
    %1 = vector.shape_cast %0 : vector<1x8x32xf32> to vector<8x32xf32>
    %2 = arith.truncf %1 : vector<8x32xf32> to vector<8x32xbf16>
    %c0_2 = arith.constant 0 : index
    %c0_3 = arith.constant 0 : index
    %3 = vector.load %arg2[%c0_2, %c0_3] : memref<32x96xbf16, #tpu.memory_space<vmem>>, vector<32x96xbf16>
    %cst = arith.constant dense<0.000000e+00> : vector<8x96xf32>
    %4 = tpu.matmul %2, %3, %cst {dimension_numbers = #tpu.dot_dimension_numbers<[1], [0], [0], [1], [0, 0, 1, 1], [], []>} : vector<8x32xbf16>, vector<32x96xbf16>, vector<8x96xf32> -> vector<8x96xf32>
    %c0_4 = arith.constant 0 : index
    %c0_5 = arith.constant 0 : index
    %5 = vector.load %arg3[%c0_4, %c0_5] : memref<1x96xf32, #tpu.memory_space<vmem>>, vector<1x96xf32>
    %6 = vector.broadcast %5 : vector<1x96xf32> to vector<8x96xf32>
    %7 = arith.addf %4, %6 : vector<8x96xf32>
    %8 = arith.truncf %7 : vector<8x96xf32> to vector<8x96xbf16>
    %c0_6 = arith.constant 0 : index
    %c0_7 = arith.constant 0 : index
    %9 = vector.load %arg7[%c0_6, %c0_7] : memref<8x96xbf16, #tpu.memory_space<vmem>>, vector<8x96xbf16>
    tpu.vector_store %arg7[%c0_6, %c0_7], %8 {strides = array<i32>} : memref<8x96xbf16, #tpu.memory_space<vmem>>, vector<8x96xbf16>,
    %c0_8 = arith.constant 0 : index
    %c0_9 = arith.constant 0 : index
    %10 = vector.load %arg7[%c0_8, %c0_9] : memref<8x96xbf16, #tpu.memory_space<vmem>>, vector<8x8xbf16>
    %c0_10 = arith.constant 0 : index
    %c32 = arith.constant 32 : index
    %11 = vector.load %arg7[%c0_10, %c32] : memref<8x96xbf16, #tpu.memory_space<vmem>>, vector<8x8xbf16>
    %c0_11 = arith.constant 0 : index
    %c64 = arith.constant 64 : index
    %12 = vector.load %arg7[%c0_11, %c64] : memref<8x96xbf16, #tpu.memory_space<vmem>>, vector<8x8xbf16>
    %cst_12 = arith.constant dense<0.000000e+00> : vector<8x8xf32>
    %13 = tpu.matmul %10, %11, %cst_12 {dimension_numbers = #tpu.dot_dimension_numbers<[1], [1], [0], [0], [0, 0, 1, 0], [], []>} : vector<8x8xbf16>, vector<8x8xbf16>, vector<8x8xf32> -> vector<8x8xf32>
    %cst_13 = arith.constant dense<0xFF800000> : vector<8xf32>
    %14 = vector.multi_reduction <maximumf>, %13, %cst_13 [1] : vector<8x8xf32> to vector<8xf32>
    %15 = vector.shape_cast %14 : vector<8xf32> to vector<8x1xf32>
    %16 = vector.broadcast %15 : vector<8x1xf32> to vector<8x8xf32>
    %17 = arith.subf %13, %16 : vector<8x8xf32>
    %18 = math.exp %17 : vector<8x8xf32>
    %cst_14 = arith.constant dense<0.000000e+00> : vector<8xf32>
    %19 = vector.multi_reduction <add>, %18, %cst_14 [1] : vector<8x8xf32> to vector<8xf32>
    %20 = vector.shape_cast %19 : vector<8xf32> to vector<8x1xf32>
    %21 = tpu.reciprocal %20 {approx = true} : vector<8x1xf32> -> vector<8x1xf32>
    %22 = vector.broadcast %21 : vector<8x1xf32> to vector<8x8xf32>
    %23 = arith.mulf %18, %22 : vector<8x8xf32>
    %24 = arith.truncf %23 : vector<8x8xf32> to vector<8x8xbf16>
    %cst_15 = arith.constant dense<0.000000e+00> : vector<8x8xf32>
    %25 = tpu.matmul %24, %12, %cst_15 {dimension_numbers = #tpu.dot_dimension_numbers<[1], [0], [0], [1], [0, 0, 1, 1], [], []>} : vector<8x8xbf16>, vector<8x8xbf16>, vector<8x8xf32> -> vector<8x8xf32>
    %26 = arith.truncf %25 : vector<8x8xf32> to vector<8x8xbf16>
    %c0_16 = arith.constant 0 : index
    %c0_17 = arith.constant 0 : index
    %27 = vector.load %arg8[%c0_16, %c0_17] : memref<8x32xbf16, #tpu.memory_space<vmem>>, vector<8x8xbf16>
    tpu.vector_store %arg8[%c0_16, %c0_17], %26 {strides = array<i32>} : memref<8x32xbf16, #tpu.memory_space<vmem>>, vector<8x8xbf16>,
    %c0_18 = arith.constant 0 : index
    %c8 = arith.constant 8 : index
    %28 = vector.load %arg7[%c0_18, %c8] : memref<8x96xbf16, #tpu.memory_space<vmem>>, vector<8x8xbf16>
    %c0_19 = arith.constant 0 : index
    %c40 = arith.constant 40 : index
    %29 = vector.load %arg7[%c0_19, %c40] : memref<8x96xbf16, #tpu.memory_space<vmem>>, vector<8x8xbf16>
    %c0_20 = arith.constant 0 : index
    %c72 = arith.constant 72 : index
    %30 = vector.load %arg7[%c0_20, %c72] : memref<8x96xbf16, #tpu.memory_space<vmem>>, vector<8x8xbf16>
    %cst_21 = arith.constant dense<0.000000e+00> : vector<8x8xf32>
    %31 = tpu.matmul %28, %29, %cst_21 {dimension_numbers = #tpu.dot_dimension_numbers<[1], [1], [0], [0], [0, 0, 1, 0], [], []>} : vector<8x8xbf16>, vector<8x8xbf16>, vector<8x8xf32> -> vector<8x8xf32>
    %cst_22 = arith.constant dense<0xFF800000> : vector<8xf32>
    %32 = vector.multi_reduction <maximumf>, %31, %cst_22 [1] : vector<8x8xf32> to vector<8xf32>
    %33 = vector.shape_cast %32 : vector<8xf32> to vector<8x1xf32>
    %34 = vector.broadcast %33 : vector<8x1xf32> to vector<8x8xf32>
    %35 = arith.subf %31, %34 : vector<8x8xf32>
    %36 = math.exp %35 : vector<8x8xf32>
    %cst_23 = arith.constant dense<0.000000e+00> : vector<8xf32>
    %37 = vector.multi_reduction <add>, %36, %cst_23 [1] : vector<8x8xf32> to vector<8xf32>
    %38 = vector.shape_cast %37 : vector<8xf32> to vector<8x1xf32>
    %39 = tpu.reciprocal %38 {approx = true} : vector<8x1xf32> -> vector<8x1xf32>
    %40 = vector.broadcast %39 : vector<8x1xf32> to vector<8x8xf32>
    %41 = arith.mulf %36, %40 : vector<8x8xf32>
    %42 = arith.truncf %41 : vector<8x8xf32> to vector<8x8xbf16>
    %cst_24 = arith.constant dense<0.000000e+00> : vector<8x8xf32>
    %43 = tpu.matmul %42, %30, %cst_24 {dimension_numbers = #tpu.dot_dimension_numbers<[1], [0], [0], [1], [0, 0, 1, 1], [], []>} : vector<8x8xbf16>, vector<8x8xbf16>, vector<8x8xf32> -> vector<8x8xf32>
    %44 = arith.truncf %43 : vector<8x8xf32> to vector<8x8xbf16>
    %c0_25 = arith.constant 0 : index
    %c8_26 = arith.constant 8 : index
    %45 = vector.load %arg8[%c0_25, %c8_26] : memref<8x32xbf16, #tpu.memory_space<vmem>>, vector<8x8xbf16>
    tpu.vector_store %arg8[%c0_25, %c8_26], %44 {strides = array<i32>} : memref<8x32xbf16, #tpu.memory_space<vmem>>, vector<8x8xbf16>,
    %c0_27 = arith.constant 0 : index
    %c16 = arith.constant 16 : index
    %46 = vector.load %arg7[%c0_27, %c16] : memref<8x96xbf16, #tpu.memory_space<vmem>>, vector<8x8xbf16>
    %c0_28 = arith.constant 0 : index
    %c48 = arith.constant 48 : index
    %47 = vector.load %arg7[%c0_28, %c48] : memref<8x96xbf16, #tpu.memory_space<vmem>>, vector<8x8xbf16>
    %c0_29 = arith.constant 0 : index
    %c80 = arith.constant 80 : index
    %48 = vector.load %arg7[%c0_29, %c80] : memref<8x96xbf16, #tpu.memory_space<vmem>>, vector<8x8xbf16>
    %cst_30 = arith.constant dense<0.000000e+00> : vector<8x8xf32>
    %49 = tpu.matmul %46, %47, %cst_30 {dimension_numbers = #tpu.dot_dimension_numbers<[1], [1], [0], [0], [0, 0, 1, 0], [], []>} : vector<8x8xbf16>, vector<8x8xbf16>, vector<8x8xf32> -> vector<8x8xf32>
    %cst_31 = arith.constant dense<0xFF800000> : vector<8xf32>
    %50 = vector.multi_reduction <maximumf>, %49, %cst_31 [1] : vector<8x8xf32> to vector<8xf32>
    %51 = vector.shape_cast %50 : vector<8xf32> to vector<8x1xf32>
    %52 = vector.broadcast %51 : vector<8x1xf32> to vector<8x8xf32>
    %53 = arith.subf %49, %52 : vector<8x8xf32>
    %54 = math.exp %53 : vector<8x8xf32>
    %cst_32 = arith.constant dense<0.000000e+00> : vector<8xf32>
    %55 = vector.multi_reduction <add>, %54, %cst_32 [1] : vector<8x8xf32> to vector<8xf32>
    %56 = vector.shape_cast %55 : vector<8xf32> to vector<8x1xf32>
    %57 = tpu.reciprocal %56 {approx = true} : vector<8x1xf32> -> vector<8x1xf32>
    %58 = vector.broadcast %57 : vector<8x1xf32> to vector<8x8xf32>
    %59 = arith.mulf %54, %58 : vector<8x8xf32>
    %60 = arith.truncf %59 : vector<8x8xf32> to vector<8x8xbf16>
    %cst_33 = arith.constant dense<0.000000e+00> : vector<8x8xf32>
    %61 = tpu.matmul %60, %48, %cst_33 {dimension_numbers = #tpu.dot_dimension_numbers<[1], [0], [0], [1], [0, 0, 1, 1], [], []>} : vector<8x8xbf16>, vector<8x8xbf16>, vector<8x8xf32> -> vector<8x8xf32>
    %62 = arith.truncf %61 : vector<8x8xf32> to vector<8x8xbf16>
    %c0_34 = arith.constant 0 : index
    %c16_35 = arith.constant 16 : index
    %63 = vector.load %arg8[%c0_34, %c16_35] : memref<8x32xbf16, #tpu.memory_space<vmem>>, vector<8x8xbf16>
    tpu.vector_store %arg8[%c0_34, %c16_35], %62 {strides = array<i32>} : memref<8x32xbf16, #tpu.memory_space<vmem>>, vector<8x8xbf16>,
    %c0_36 = arith.constant 0 : index
    %c24 = arith.constant 24 : index
    %64 = vector.load %arg7[%c0_36, %c24] : memref<8x96xbf16, #tpu.memory_space<vmem>>, vector<8x8xbf16>
    %c0_37 = arith.constant 0 : index
    %c56 = arith.constant 56 : index
    %65 = vector.load %arg7[%c0_37, %c56] : memref<8x96xbf16, #tpu.memory_space<vmem>>, vector<8x8xbf16>
    %c0_38 = arith.constant 0 : index
    %c88 = arith.constant 88 : index
    %66 = vector.load %arg7[%c0_38, %c88] : memref<8x96xbf16, #tpu.memory_space<vmem>>, vector<8x8xbf16>
    %cst_39 = arith.constant dense<0.000000e+00> : vector<8x8xf32>
    %67 = tpu.matmul %64, %65, %cst_39 {dimension_numbers = #tpu.dot_dimension_numbers<[1], [1], [0], [0], [0, 0, 1, 0], [], []>} : vector<8x8xbf16>, vector<8x8xbf16>, vector<8x8xf32> -> vector<8x8xf32>
    %cst_40 = arith.constant dense<0xFF800000> : vector<8xf32>
    %68 = vector.multi_reduction <maximumf>, %67, %cst_40 [1] : vector<8x8xf32> to vector<8xf32>
    %69 = vector.shape_cast %68 : vector<8xf32> to vector<8x1xf32>
    %70 = vector.broadcast %69 : vector<8x1xf32> to vector<8x8xf32>
    %71 = arith.subf %67, %70 : vector<8x8xf32>
    %72 = math.exp %71 : vector<8x8xf32>
    %cst_41 = arith.constant dense<0.000000e+00> : vector<8xf32>
    %73 = vector.multi_reduction <add>, %72, %cst_41 [1] : vector<8x8xf32> to vector<8xf32>
    %74 = vector.shape_cast %73 : vector<8xf32> to vector<8x1xf32>
    %75 = tpu.reciprocal %74 {approx = true} : vector<8x1xf32> -> vector<8x1xf32>
    %76 = vector.broadcast %75 : vector<8x1xf32> to vector<8x8xf32>
    %77 = arith.mulf %72, %76 : vector<8x8xf32>
    %78 = arith.truncf %77 : vector<8x8xf32> to vector<8x8xbf16>
    %cst_42 = arith.constant dense<0.000000e+00> : vector<8x8xf32>
    %79 = tpu.matmul %78, %66, %cst_42 {dimension_numbers = #tpu.dot_dimension_numbers<[1], [0], [0], [1], [0, 0, 1, 1], [], []>} : vector<8x8xbf16>, vector<8x8xbf16>, vector<8x8xf32> -> vector<8x8xf32>
    %80 = arith.truncf %79 : vector<8x8xf32> to vector<8x8xbf16>
    %c0_43 = arith.constant 0 : index
    %c24_44 = arith.constant 24 : index
    %81 = vector.load %arg8[%c0_43, %c24_44] : memref<8x32xbf16, #tpu.memory_space<vmem>>, vector<8x8xbf16>
    tpu.vector_store %arg8[%c0_43, %c24_44], %80 {strides = array<i32>} : memref<8x32xbf16, #tpu.memory_space<vmem>>, vector<8x8xbf16>,
    %c0_45 = arith.constant 0 : index
    %c0_46 = arith.constant 0 : index
    %82 = vector.load %arg5[%c0_45, %c0_46] : memref<3x32xf32, #tpu.memory_space<vmem>>, vector<1x32xf32>
    %c1 = arith.constant 1 : index
    %c0_47 = arith.constant 0 : index
    %83 = vector.load %arg5[%c1, %c0_47] : memref<3x32xf32, #tpu.memory_space<vmem>>, vector<1x32xf32>
    %c2 = arith.constant 2 : index
    %c0_48 = arith.constant 0 : index
    %84 = vector.load %arg5[%c2, %c0_48] : memref<3x32xf32, #tpu.memory_space<vmem>>, vector<1x32xf32>
    %c0_49 = arith.constant 0 : index
    %c0_50 = arith.constant 0 : index
    %85 = vector.load %arg8[%c0_49, %c0_50] : memref<8x32xbf16, #tpu.memory_space<vmem>>, vector<8x32xbf16>
    %c0_51 = arith.constant 0 : index
    %c0_52 = arith.constant 0 : index
    %86 = vector.load %arg4[%c0_51, %c0_52] : memref<32x32xbf16, #tpu.memory_space<vmem>>, vector<32x32xbf16>
    %cst_53 = arith.constant dense<0.000000e+00> : vector<8x32xf32>
    %87 = tpu.matmul %85, %86, %cst_53 {dimension_numbers = #tpu.dot_dimension_numbers<[1], [0], [0], [1], [0, 0, 1, 1], [], []>} : vector<8x32xbf16>, vector<32x32xbf16>, vector<8x32xf32> -> vector<8x32xf32>
    %88 = vector.broadcast %82 : vector<1x32xf32> to vector<8x32xf32>
    %89 = arith.addf %87, %88 : vector<8x32xf32>
    %90 = arith.addf %1, %89 : vector<8x32xf32>
    %cst_54 = arith.constant dense<0.000000e+00> : vector<8xf32>
    %91 = vector.multi_reduction <add>, %90, %cst_54 [1] : vector<8x32xf32> to vector<8xf32>
    %92 = vector.shape_cast %91 : vector<8xf32> to vector<8x1xf32>
    %cst_55 = arith.constant 3.200000e+01 : f32
    %93 = vector.broadcast %cst_55 : f32 to vector<8x1xf32>
    %94 = arith.divf %92, %93 : vector<8x1xf32>
    %95 = vector.broadcast %94 : vector<8x1xf32> to vector<8x32xf32>
    %96 = arith.subf %90, %95 : vector<8x32xf32>
    %97 = arith.mulf %96, %96 : vector<8x32xf32>
    %cst_56 = arith.constant dense<0.000000e+00> : vector<8xf32>
    %98 = vector.multi_reduction <add>, %97, %cst_56 [1] : vector<8x32xf32> to vector<8xf32>
    %99 = vector.shape_cast %98 : vector<8xf32> to vector<8x1xf32>
    %cst_57 = arith.constant 3.200000e+01 : f32
    %100 = vector.broadcast %cst_57 : f32 to vector<8x1xf32>
    %101 = arith.divf %99, %100 : vector<8x1xf32>
    %102 = vector.broadcast %94 : vector<8x1xf32> to vector<8x32xf32>
    %103 = arith.subf %90, %102 : vector<8x32xf32>
    %cst_58 = arith.constant 9.99999974E-6 : f32
    %104 = vector.broadcast %cst_58 : f32 to vector<8x1xf32>
    %105 = arith.addf %101, %104 : vector<8x1xf32>
    %106 = math.rsqrt %105 : vector<8x1xf32>
    %107 = vector.broadcast %106 : vector<8x1xf32> to vector<8x32xf32>
    %108 = arith.mulf %103, %107 : vector<8x32xf32>
    %109 = vector.broadcast %83 : vector<1x32xf32> to vector<8x32xf32>
    %110 = arith.mulf %108, %109 : vector<8x32xf32>
    %111 = vector.broadcast %84 : vector<1x32xf32> to vector<8x32xf32>
    %112 = arith.addf %110, %111 : vector<8x32xf32>
    %c0_59 = arith.constant 0 : index
    %c0_60 = arith.constant 0 : index
    %c0_61 = arith.constant 0 : index
    %113 = vector.load %arg6[%c0_59, %c0_60, %c0_61] : memref<1x8x32xf32, #tpu.memory_space<vmem>>, vector<1x8x32xf32>
    %114 = vector.shape_cast %113 : vector<1x8x32xf32> to vector<8x32xf32>
    %115 = vector.shape_cast %112 : vector<8x32xf32> to vector<1x8x32xf32>
    tpu.vector_store %arg6[%c0_59, %c0_60, %c0_61], %115 {strides = array<i32>} : memref<1x8x32xf32, #tpu.memory_space<vmem>>, vector<1x8x32xf32>,
    return
  }
  func.func @transform_0(%arg0: i32) -> (i32, i32, i32) {
    %c0_i32 = arith.constant 0 : i32
    %c0_i32_0 = arith.constant 0 : i32
    %c0_i32_1 = arith.constant 0 : i32
    return %arg0, %c0_i32, %c0_i32_0 : i32, i32, i32
  }
  func.func @transform_1(%arg0: i32) -> (i32, i32) {
    %c0_i32 = arith.constant 0 : i32
    %c0_i32_0 = arith.constant 0 : i32
    %c0_i32_1 = arith.constant 0 : i32
    return %c0_i32, %c0_i32_0 : i32, i32
  }
  func.func @transform_2(%arg0: i32) -> (i32, i32) {
    %c0_i32 = arith.constant 0 : i32
    %c0_i32_0 = arith.constant 0 : i32
    %c0_i32_1 = arith.constant 0 : i32
    return %c0_i32, %c0_i32_0 : i32, i32
  }
  func.func @transform_3(%arg0: i32) -> (i32, i32) {
    %c0_i32 = arith.constant 0 : i32
    %c0_i32_0 = arith.constant 0 : i32
    %c0_i32_1 = arith.constant 0 : i32
    return %c0_i32, %c0_i32_0 : i32, i32
  }
  func.func @transform_4(%arg0: i32) -> (i32, i32) {
    %c0_i32 = arith.constant 0 : i32
    %c0_i32_0 = arith.constant 0 : i32
    %c0_i32_1 = arith.constant 0 : i32
    return %c0_i32, %c0_i32_0 : i32, i32
  }
  func.func @transform_5(%arg0: i32) -> (i32, i32, i32) {
    %c0_i32 = arith.constant 0 : i32
    %c0_i32_0 = arith.constant 0 : i32
    %c0_i32_1 = arith.constant 0 : i32
    return %arg0, %c0_i32, %c0_i32_0 : i32, i32, i32
  }
}

module attributes {stable_mosaic.version = 11 : i64} {
  func.func @_attn_ln1_kernel(%arg0: i32, %arg1: memref<1x8x32xf32, #tpu.memory_space<vmem>>, %arg2: memref<32x96xbf16, #tpu.memory_space<vmem>>, %arg3: memref<1x96xf32, #tpu.memory_space<vmem>>, %arg4: memref<32x32xbf16, #tpu.memory_space<vmem>>, %arg5: memref<3x32xf32, #tpu.memory_space<vmem>>, %arg6: memref<1x8x32xf32, #tpu.memory_space<vmem>>, %arg7: memref<8x96xbf16, #tpu.memory_space<vmem>>, %arg8: memref<8x32xbf16, #tpu.memory_space<vmem>>) attributes {dimension_semantics = [#tpu.dimension_semantics<parallel>], iteration_bounds = array<i64: 2>, scalar_prefetch = 0 : i64, scratch_operands = 2 : i64, tpu.core_type = #tpu.core_type<tc>, window_params = [{transform_indices = @transform_0, window_bounds = array<i64: 1, 8, 32>}, {pipeline_mode = #tpu.pipeline_mode<synchronous>, transform_indices = @transform_1, window_bounds = array<i64: 32, 96>}, {pipeline_mode = #tpu.pipeline_mode<synchronous>, transform_indices = @transform_2, window_bounds = array<i64: 1, 96>}, {pipeline_mode = #tpu.pipeline_mode<synchronous>, transform_indices = @transform_3, window_bounds = array<i64: 32, 32>}, {pipeline_mode = #tpu.pipeline_mode<synchronous>, transform_indices = @transform_4, window_bounds = array<i64: 3, 32>}, {transform_indices = @transform_5, window_bounds = array<i64: 1, 8, 32>}]} {
    %c0 = arith.constant 0 : index
    %c0_0 = arith.constant 0 : index
    %c0_1 = arith.constant 0 : index
    %0 = vector.load %arg1[%c0, %c0_0, %c0_1] : memref<1x8x32xf32, #tpu.memory_space<vmem>>, vector<1x8x32xf32>
    %1 = vector.shape_cast %0 : vector<1x8x32xf32> to vector<8x32xf32>
    %2 = arith.truncf %1 : vector<8x32xf32> to vector<8x32xbf16>
    %c0_2 = arith.constant 0 : index
    %c0_3 = arith.constant 0 : index
    %3 = vector.load %arg2[%c0_2, %c0_3] : memref<32x96xbf16, #tpu.memory_space<vmem>>, vector<32x96xbf16>
    %cst = arith.constant dense<0.000000e+00> : vector<8x96xf32>
    %4 = tpu.matmul %2, %3, %cst {dimension_numbers = #tpu.dot_dimension_numbers<[1], [0], [0], [1], [0, 0, 1, 1], [], []>} : vector<8x32xbf16>, vector<32x96xbf16>, vector<8x96xf32> -> vector<8x96xf32>
    %c0_4 = arith.constant 0 : index
    %c0_5 = arith.constant 0 : index
    %5 = vector.load %arg3[%c0_4, %c0_5] : memref<1x96xf32, #tpu.memory_space<vmem>>, vector<1x96xf32>
    %6 = vector.broadcast %5 : vector<1x96xf32> to vector<8x96xf32>
    %7 = arith.addf %4, %6 : vector<8x96xf32>
    %8 = arith.truncf %7 : vector<8x96xf32> to vector<8x96xbf16>
    %c0_6 = arith.constant 0 : index
    %c0_7 = arith.constant 0 : index
    %9 = vector.load %arg7[%c0_6, %c0_7] : memref<8x96xbf16, #tpu.memory_space<vmem>>, vector<8x96xbf16>
    tpu.vector_store %arg7[%c0_6, %c0_7], %8 {strides = array<i32>} : memref<8x96xbf16, #tpu.memory_space<vmem>>, vector<8x96xbf16>,
    %c0_8 = arith.constant 0 : index
    %c0_9 = arith.constant 0 : index
    %10 = vector.load %arg7[%c0_8, %c0_9] : memref<8x96xbf16, #tpu.memory_space<vmem>>, vector<8x8xbf16>
    %c0_10 = arith.constant 0 : index
    %c32 = arith.constant 32 : index
    %11 = vector.load %arg7[%c0_10, %c32] : memref<8x96xbf16, #tpu.memory_space<vmem>>, vector<8x8xbf16>
    %c0_11 = arith.constant 0 : index
    %c64 = arith.constant 64 : index
    %12 = vector.load %arg7[%c0_11, %c64] : memref<8x96xbf16, #tpu.memory_space<vmem>>, vector<8x8xbf16>
    %cst_12 = arith.constant dense<0.000000e+00> : vector<8x8xf32>
    %13 = tpu.matmul %10, %11, %cst_12 {dimension_numbers = #tpu.dot_dimension_numbers<[1], [1], [0], [0], [0, 0, 1, 0], [], []>} : vector<8x8xbf16>, vector<8x8xbf16>, vector<8x8xf32> -> vector<8x8xf32>
    %cst_13 = arith.constant dense<0xFF800000> : vector<8xf32>
    %14 = vector.multi_reduction <maximumf>, %13, %cst_13 [1] : vector<8x8xf32> to vector<8xf32>
    %15 = vector.shape_cast %14 : vector<8xf32> to vector<8x1xf32>
    %16 = vector.broadcast %15 : vector<8x1xf32> to vector<8x8xf32>
    %17 = arith.subf %13, %16 : vector<8x8xf32>
    %18 = math.exp %17 : vector<8x8xf32>
    %cst_14 = arith.constant dense<0.000000e+00> : vector<8xf32>
    %19 = vector.multi_reduction <add>, %18, %cst_14 [1] : vector<8x8xf32> to vector<8xf32>
    %20 = vector.shape_cast %19 : vector<8xf32> to vector<8x1xf32>
    %21 = tpu.reciprocal %20 {approx = true} : vector<8x1xf32> -> vector<8x1xf32>
    %22 = vector.broadcast %21 : vector<8x1xf32> to vector<8x8xf32>
    %23 = arith.mulf %18, %22 : vector<8x8xf32>
    %24 = arith.truncf %23 : vector<8x8xf32> to vector<8x8xbf16>
    %cst_15 = arith.constant dense<0.000000e+00> : vector<8x8xf32>
    %25 = tpu.matmul %24, %12, %cst_15 {dimension_numbers = #tpu.dot_dimension_numbers<[1], [0], [0], [1], [0, 0, 1, 1], [], []>} : vector<8x8xbf16>, vector<8x8xbf16>, vector<8x8xf32> -> vector<8x8xf32>
    %26 = arith.truncf %25 : vector<8x8xf32> to vector<8x8xbf16>
    %c0_16 = arith.constant 0 : index
    %c0_17 = arith.constant 0 : index
    %27 = vector.load %arg8[%c0_16, %c0_17] : memref<8x32xbf16, #tpu.memory_space<vmem>>, vector<8x8xbf16>
    tpu.vector_store %arg8[%c0_16, %c0_17], %26 {strides = array<i32>} : memref<8x32xbf16, #tpu.memory_space<vmem>>, vector<8x8xbf16>,
    %c0_18 = arith.constant 0 : index
    %c8 = arith.constant 8 : index
    %28 = vector.load %arg7[%c0_18, %c8] : memref<8x96xbf16, #tpu.memory_space<vmem>>, vector<8x8xbf16>
    %c0_19 = arith.constant 0 : index
    %c40 = arith.constant 40 : index
    %29 = vector.load %arg7[%c0_19, %c40] : memref<8x96xbf16, #tpu.memory_space<vmem>>, vector<8x8xbf16>
    %c0_20 = arith.constant 0 : index
    %c72 = arith.constant 72 : index
    %30 = vector.load %arg7[%c0_20, %c72] : memref<8x96xbf16, #tpu.memory_space<vmem>>, vector<8x8xbf16>
    %cst_21 = arith.constant dense<0.000000e+00> : vector<8x8xf32>
    %31 = tpu.matmul %28, %29, %cst_21 {dimension_numbers = #tpu.dot_dimension_numbers<[1], [1], [0], [0], [0, 0, 1, 0], [], []>} : vector<8x8xbf16>, vector<8x8xbf16>, vector<8x8xf32> -> vector<8x8xf32>
    %cst_22 = arith.constant dense<0xFF800000> : vector<8xf32>
    %32 = vector.multi_reduction <maximumf>, %31, %cst_22 [1] : vector<8x8xf32> to vector<8xf32>
    %33 = vector.shape_cast %32 : vector<8xf32> to vector<8x1xf32>
    %34 = vector.broadcast %33 : vector<8x1xf32> to vector<8x8xf32>
    %35 = arith.subf %31, %34 : vector<8x8xf32>
    %36 = math.exp %35 : vector<8x8xf32>
    %cst_23 = arith.constant dense<0.000000e+00> : vector<8xf32>
    %37 = vector.multi_reduction <add>, %36, %cst_23 [1] : vector<8x8xf32> to vector<8xf32>
    %38 = vector.shape_cast %37 : vector<8xf32> to vector<8x1xf32>
    %39 = tpu.reciprocal %38 {approx = true} : vector<8x1xf32> -> vector<8x1xf32>
    %40 = vector.broadcast %39 : vector<8x1xf32> to vector<8x8xf32>
    %41 = arith.mulf %36, %40 : vector<8x8xf32>
    %42 = arith.truncf %41 : vector<8x8xf32> to vector<8x8xbf16>
    %cst_24 = arith.constant dense<0.000000e+00> : vector<8x8xf32>
    %43 = tpu.matmul %42, %30, %cst_24 {dimension_numbers = #tpu.dot_dimension_numbers<[1], [0], [0], [1], [0, 0, 1, 1], [], []>} : vector<8x8xbf16>, vector<8x8xbf16>, vector<8x8xf32> -> vector<8x8xf32>
    %44 = arith.truncf %43 : vector<8x8xf32> to vector<8x8xbf16>
    %c0_25 = arith.constant 0 : index
    %c8_26 = arith.constant 8 : index
    %45 = vector.load %arg8[%c0_25, %c8_26] : memref<8x32xbf16, #tpu.memory_space<vmem>>, vector<8x8xbf16>
    tpu.vector_store %arg8[%c0_25, %c8_26], %44 {strides = array<i32>} : memref<8x32xbf16, #tpu.memory_space<vmem>>, vector<8x8xbf16>,
    %c0_27 = arith.constant 0 : index
    %c16 = arith.constant 16 : index
    %46 = vector.load %arg7[%c0_27, %c16] : memref<8x96xbf16, #tpu.memory_space<vmem>>, vector<8x8xbf16>
    %c0_28 = arith.constant 0 : index
    %c48 = arith.constant 48 : index
    %47 = vector.load %arg7[%c0_28, %c48] : memref<8x96xbf16, #tpu.memory_space<vmem>>, vector<8x8xbf16>
    %c0_29 = arith.constant 0 : index
    %c80 = arith.constant 80 : index
    %48 = vector.load %arg7[%c0_29, %c80] : memref<8x96xbf16, #tpu.memory_space<vmem>>, vector<8x8xbf16>
    %cst_30 = arith.constant dense<0.000000e+00> : vector<8x8xf32>
    %49 = tpu.matmul %46, %47, %cst_30 {dimension_numbers = #tpu.dot_dimension_numbers<[1], [1], [0], [0], [0, 0, 1, 0], [], []>} : vector<8x8xbf16>, vector<8x8xbf16>, vector<8x8xf32> -> vector<8x8xf32>
    %cst_31 = arith.constant dense<0xFF800000> : vector<8xf32>
    %50 = vector.multi_reduction <maximumf>, %49, %cst_31 [1] : vector<8x8xf32> to vector<8xf32>
    %51 = vector.shape_cast %50 : vector<8xf32> to vector<8x1xf32>
    %52 = vector.broadcast %51 : vector<8x1xf32> to vector<8x8xf32>
    %53 = arith.subf %49, %52 : vector<8x8xf32>
    %54 = math.exp %53 : vector<8x8xf32>
    %cst_32 = arith.constant dense<0.000000e+00> : vector<8xf32>
    %55 = vector.multi_reduction <add>, %54, %cst_32 [1] : vector<8x8xf32> to vector<8xf32>
    %56 = vector.shape_cast %55 : vector<8xf32> to vector<8x1xf32>
    %57 = tpu.reciprocal %56 {approx = true} : vector<8x1xf32> -> vector<8x1xf32>
    %58 = vector.broadcast %57 : vector<8x1xf32> to vector<8x8xf32>
    %59 = arith.mulf %54, %58 : vector<8x8xf32>
    %60 = arith.truncf %59 : vector<8x8xf32> to vector<8x8xbf16>
    %cst_33 = arith.constant dense<0.000000e+00> : vector<8x8xf32>
    %61 = tpu.matmul %60, %48, %cst_33 {dimension_numbers = #tpu.dot_dimension_numbers<[1], [0], [0], [1], [0, 0, 1, 1], [], []>} : vector<8x8xbf16>, vector<8x8xbf16>, vector<8x8xf32> -> vector<8x8xf32>
    %62 = arith.truncf %61 : vector<8x8xf32> to vector<8x8xbf16>
    %c0_34 = arith.constant 0 : index
    %c16_35 = arith.constant 16 : index
    %63 = vector.load %arg8[%c0_34, %c16_35] : memref<8x32xbf16, #tpu.memory_space<vmem>>, vector<8x8xbf16>
    tpu.vector_store %arg8[%c0_34, %c16_35], %62 {strides = array<i32>} : memref<8x32xbf16, #tpu.memory_space<vmem>>, vector<8x8xbf16>,
    %c0_36 = arith.constant 0 : index
    %c24 = arith.constant 24 : index
    %64 = vector.load %arg7[%c0_36, %c24] : memref<8x96xbf16, #tpu.memory_space<vmem>>, vector<8x8xbf16>
    %c0_37 = arith.constant 0 : index
    %c56 = arith.constant 56 : index
    %65 = vector.load %arg7[%c0_37, %c56] : memref<8x96xbf16, #tpu.memory_space<vmem>>, vector<8x8xbf16>
    %c0_38 = arith.constant 0 : index
    %c88 = arith.constant 88 : index
    %66 = vector.load %arg7[%c0_38, %c88] : memref<8x96xbf16, #tpu.memory_space<vmem>>, vector<8x8xbf16>
    %cst_39 = arith.constant dense<0.000000e+00> : vector<8x8xf32>
    %67 = tpu.matmul %64, %65, %cst_39 {dimension_numbers = #tpu.dot_dimension_numbers<[1], [1], [0], [0], [0, 0, 1, 0], [], []>} : vector<8x8xbf16>, vector<8x8xbf16>, vector<8x8xf32> -> vector<8x8xf32>
    %cst_40 = arith.constant dense<0xFF800000> : vector<8xf32>
    %68 = vector.multi_reduction <maximumf>, %67, %cst_40 [1] : vector<8x8xf32> to vector<8xf32>
    %69 = vector.shape_cast %68 : vector<8xf32> to vector<8x1xf32>
    %70 = vector.broadcast %69 : vector<8x1xf32> to vector<8x8xf32>
    %71 = arith.subf %67, %70 : vector<8x8xf32>
    %72 = math.exp %71 : vector<8x8xf32>
    %cst_41 = arith.constant dense<0.000000e+00> : vector<8xf32>
    %73 = vector.multi_reduction <add>, %72, %cst_41 [1] : vector<8x8xf32> to vector<8xf32>
    %74 = vector.shape_cast %73 : vector<8xf32> to vector<8x1xf32>
    %75 = tpu.reciprocal %74 {approx = true} : vector<8x1xf32> -> vector<8x1xf32>
    %76 = vector.broadcast %75 : vector<8x1xf32> to vector<8x8xf32>
    %77 = arith.mulf %72, %76 : vector<8x8xf32>
    %78 = arith.truncf %77 : vector<8x8xf32> to vector<8x8xbf16>
    %cst_42 = arith.constant dense<0.000000e+00> : vector<8x8xf32>
    %79 = tpu.matmul %78, %66, %cst_42 {dimension_numbers = #tpu.dot_dimension_numbers<[1], [0], [0], [1], [0, 0, 1, 1], [], []>} : vector<8x8xbf16>, vector<8x8xbf16>, vector<8x8xf32> -> vector<8x8xf32>
    %80 = arith.truncf %79 : vector<8x8xf32> to vector<8x8xbf16>
    %c0_43 = arith.constant 0 : index
    %c24_44 = arith.constant 24 : index
    %81 = vector.load %arg8[%c0_43, %c24_44] : memref<8x32xbf16, #tpu.memory_space<vmem>>, vector<8x8xbf16>
    tpu.vector_store %arg8[%c0_43, %c24_44], %80 {strides = array<i32>} : memref<8x32xbf16, #tpu.memory_space<vmem>>, vector<8x8xbf16>,
    %c0_45 = arith.constant 0 : index
    %c0_46 = arith.constant 0 : index
    %82 = vector.load %arg5[%c0_45, %c0_46] : memref<3x32xf32, #tpu.memory_space<vmem>>, vector<1x32xf32>
    %c1 = arith.constant 1 : index
    %c0_47 = arith.constant 0 : index
    %83 = vector.load %arg5[%c1, %c0_47] : memref<3x32xf32, #tpu.memory_space<vmem>>, vector<1x32xf32>
    %c2 = arith.constant 2 : index
    %c0_48 = arith.constant 0 : index
    %84 = vector.load %arg5[%c2, %c0_48] : memref<3x32xf32, #tpu.memory_space<vmem>>, vector<1x32xf32>
    %c0_49 = arith.constant 0 : index
    %c0_50 = arith.constant 0 : index
    %85 = vector.load %arg8[%c0_49, %c0_50] : memref<8x32xbf16, #tpu.memory_space<vmem>>, vector<8x32xbf16>
    %c0_51 = arith.constant 0 : index
    %c0_52 = arith.constant 0 : index
    %86 = vector.load %arg4[%c0_51, %c0_52] : memref<32x32xbf16, #tpu.memory_space<vmem>>, vector<32x32xbf16>
    %cst_53 = arith.constant dense<0.000000e+00> : vector<8x32xf32>
    %87 = tpu.matmul %85, %86, %cst_53 {dimension_numbers = #tpu.dot_dimension_numbers<[1], [0], [0], [1], [0, 0, 1, 1], [], []>} : vector<8x32xbf16>, vector<32x32xbf16>, vector<8x32xf32> -> vector<8x32xf32>
    %88 = vector.broadcast %82 : vector<1x32xf32> to vector<8x32xf32>
    %89 = arith.addf %87, %88 : vector<8x32xf32>
    %90 = arith.addf %1, %89 : vector<8x32xf32>
    %cst_54 = arith.constant dense<0.000000e+00> : vector<8xf32>
    %91 = vector.multi_reduction <add>, %90, %cst_54 [1] : vector<8x32xf32> to vector<8xf32>
    %92 = vector.shape_cast %91 : vector<8xf32> to vector<8x1xf32>
    %cst_55 = arith.constant 3.200000e+01 : f32
    %93 = vector.broadcast %cst_55 : f32 to vector<8x1xf32>
    %94 = arith.divf %92, %93 : vector<8x1xf32>
    %95 = vector.broadcast %94 : vector<8x1xf32> to vector<8x32xf32>
    %96 = arith.subf %90, %95 : vector<8x32xf32>
    %97 = arith.mulf %96, %96 : vector<8x32xf32>
    %cst_56 = arith.constant dense<0.000000e+00> : vector<8xf32>
    %98 = vector.multi_reduction <add>, %97, %cst_56 [1] : vector<8x32xf32> to vector<8xf32>
    %99 = vector.shape_cast %98 : vector<8xf32> to vector<8x1xf32>
    %cst_57 = arith.constant 3.200000e+01 : f32
    %100 = vector.broadcast %cst_57 : f32 to vector<8x1xf32>
    %101 = arith.divf %99, %100 : vector<8x1xf32>
    %102 = vector.broadcast %94 : vector<8x1xf32> to vector<8x32xf32>
    %103 = arith.subf %90, %102 : vector<8x32xf32>
    %cst_58 = arith.constant 9.99999974E-6 : f32
    %104 = vector.broadcast %cst_58 : f32 to vector<8x1xf32>
    %105 = arith.addf %101, %104 : vector<8x1xf32>
    %106 = math.rsqrt %105 : vector<8x1xf32>
    %107 = vector.broadcast %106 : vector<8x1xf32> to vector<8x32xf32>
    %108 = arith.mulf %103, %107 : vector<8x32xf32>
    %109 = vector.broadcast %83 : vector<1x32xf32> to vector<8x32xf32>
    %110 = arith.mulf %108, %109 : vector<8x32xf32>
    %111 = vector.broadcast %84 : vector<1x32xf32> to vector<8x32xf32>
    %112 = arith.addf %110, %111 : vector<8x32xf32>
    %c0_59 = arith.constant 0 : index
    %c0_60 = arith.constant 0 : index
    %c0_61 = arith.constant 0 : index
    %113 = vector.load %arg6[%c0_59, %c0_60, %c0_61] : memref<1x8x32xf32, #tpu.memory_space<vmem>>, vector<1x8x32xf32>
    %114 = vector.shape_cast %113 : vector<1x8x32xf32> to vector<8x32xf32>
    %115 = vector.shape_cast %112 : vector<8x32xf32> to vector<1x8x32xf32>
    tpu.vector_store %arg6[%c0_59, %c0_60, %c0_61], %115 {strides = array<i32>} : memref<1x8x32xf32, #tpu.memory_space<vmem>>, vector<1x8x32xf32>,
    return
  }
  func.func @transform_0(%arg0: i32) -> (i32, i32, i32) {
    %c0_i32 = arith.constant 0 : i32
    %c0_i32_0 = arith.constant 0 : i32
    %c0_i32_1 = arith.constant 0 : i32
    return %arg0, %c0_i32, %c0_i32_0 : i32, i32, i32
  }
  func.func @transform_1(%arg0: i32) -> (i32, i32) {
    %c0_i32 = arith.constant 0 : i32
    %c0_i32_0 = arith.constant 0 : i32
    %c0_i32_1 = arith.constant 0 : i32
    return %c0_i32, %c0_i32_0 : i32, i32
  }
  func.func @transform_2(%arg0: i32) -> (i32, i32) {
    %c0_i32 = arith.constant 0 : i32
    %c0_i32_0 = arith.constant 0 : i32
    %c0_i32_1 = arith.constant 0 : i32
    return %c0_i32, %c0_i32_0 : i32, i32
  }
  func.func @transform_3(%arg0: i32) -> (i32, i32) {
    %c0_i32 = arith.constant 0 : i32
    %c0_i32_0 = arith.constant 0 : i32
    %c0_i32_1 = arith.constant 0 : i32
    return %c0_i32, %c0_i32_0 : i32, i32
  }
  func.func @transform_4(%arg0: i32) -> (i32, i32) {
    %c0_i32 = arith.constant 0 : i32
    %c0_i32_0 = arith.constant 0 : i32
    %c0_i32_1 = arith.constant 0 : i32
    return %c0_i32, %c0_i32_0 : i32, i32
  }
  func.func @transform_5(%arg0: i32) -> (i32, i32, i32) {
    %c0_i32 = arith.constant 0 : i32
    %c0_i32_0 = arith.constant 0 : i32
    %c0_i32_1 = arith.constant 0 : i32
    return %arg0, %c0_i32, %c0_i32_0 : i32, i32, i32
  }
}

</mosaic_0001>

<llo_original>
// kernel: tpu_custom_call.1
$region0: #{tpu_custom_call.1}
  #allocation0 [shape = 'u32[]', space=smem, size = 0x4, offset = 0x4, fixed_abs, tag = 'smem constant byte address 0x4 - core index']
  #allocation1 [shape = 'u32[144,128]{1,0:T(1,128)}', space=vmem, size = 0x12000, scoped, tag = 'internal scratch']
  #allocation2 [shape = 'bf16[8,96]{1,0:T(8,128)(2,1)}', space=vmem, size = 0x800, scoped, tag = 'scratch operand']
  #allocation3 [shape = 'bf16[8,32]{1,0:T(8,128)(2,1)}', space=vmem, size = 0x800, scoped, tag = 'scratch operand']
  %s0 = inlined_call_operand.hbm [shape: f32[2,8,32], index: 0, kind: input, shape index: {}]
  %s1 = inlined_call_operand.hbm [shape: bf16[32,96], index: 1, kind: input, shape index: {}]
  %s2 = inlined_call_operand.vmem [shape: f32[1,96], index: 2, kind: input, shape index: {}]
  %s3 = inlined_call_operand.hbm [shape: bf16[32,32], index: 3, kind: input, shape index: {}]
  %s4 = inlined_call_operand.vmem [shape: f32[3,32], index: 4, kind: input, shape index: {}]
  %s5 = inlined_call_operand.hbm [shape: f32[2,8,32], index: 5, kind: output, shape index: {}]
  %s6 = sld [smem:[#allocation0]]
  $region65: #{tpu_custom_call.1} parent=0
    _
  %s8 = ssub.s32 1, %s6
  %s9 = scalar_select 0, %s8, %s6
  $region1: #{tpu_custom_call.1} parent=0
    #allocation4 [shape = 'u8[8192]{0}', space=vmem, size = 0x2000, scoped, tag = 'input window, operand 0']
    #allocation5 [shape = 's32[2]{0}', space=sflag, size = 0x8, scoped, tag = 'scoped memory for tpu_custom_call.1']
    #allocation6 [shape = 's32[2]{0}', space=sflag, size = 0x8, scoped, tag = 'scoped memory for tpu_custom_call.1']
    #allocation7 [shape = 'u8[8192]{0}', space=vmem, size = 0x2000, scoped, tag = 'input window, operand 1, single buffered']
    #allocation8 [shape = 's32[1]{0}', space=sflag, size = 0x4, scoped, tag = 'scoped memory for tpu_custom_call.1']
    #allocation9 [shape = 'u8[8192]{0}', space=vmem, size = 0x2000, scoped, tag = 'input window, operand 3, single buffered']
    #allocation10 [shape = 'u8[8192]{0}', space=vmem, size = 0x2000, scoped, tag = 'output window, operand 0']
    %10 = vsyncpa [#allocation5], 0
    %s11 = scalar_lea.sflag [#allocation5], 1
    %12 = vsyncpa %s11, 0
    %13 = vsyncpa [#allocation8], 0
    %14 = vsyncpa [#allocation6], 0
    %s15 = scalar_lea.sflag [#allocation6], 1
    %16 = vsyncpa %s15, 0
    loop: start=0, step=1, limit=4
    $region2: #{tpu_custom_call.1} parent=1 // loop_pre_header
      _
    $region3: #{tpu_custom_call.1} parent=1 // loop_header
      %s18 = sphi 0, %s22
      %p19 = scmp.ge.s32.totalorder %s18, 4
      %s28 = sphi 0, %s30
      %s31 = sphi 0, %s28
      %s32 = sphi 0, %s31
      %s48 = sphi 0, %s32
      %s52 = sphi 0, %s52
      %s54 = sphi 0, %s52
      %s55 = sphi 0, %s54
      %s69 = sphi 0, %s55
      %s73 = sphi 0, %s73
      %s75 = sphi 0, %s73
      %s76 = sphi 0, %s75
      %s90 = sphi 0, %s76
      %s94 = sphi 0, %s94
      %s96 = sphi 0, %s94
      %s97 = sphi 0, %s96
      %s111 = sphi 0, %s97
      %s115 = sphi 0, %s115
      %s117 = sphi 0, %s115
      %s118 = sphi 0, %s117
      %s132 = sphi 0, %s118
      %s138 = sphi 0, %s140
      %s141 = sphi 0, %s138
      %s142 = sphi 0, %s141
      %s158 = sphi 0, %s142
    $region4: #{tpu_custom_call.1} parent=1 // loop_header_branch
      %21 = sbr.rel (%p19) target = $region8
    $region5: #{tpu_custom_call.1} parent=1 // loop_body
      %s23 = ssub.s32 %s18, 1
      %s24 = ssub.s32 %s18, 2
      %s25 = sadd.s32 %s18, 1
      %s26 = ssub.s32 %s18, %s25
      %p27 = scmp.eq.s32.totalorder %s26, 0
      %s29 = sadd.s32 %s28, 1
      %s30 = scalar_select %p27, %s28, %s29
      %p33 = pneg %p27
      %p34 = scmp.eq.s32.totalorder %s18, 1
      %p35 = por %p33, %p34
      %p36 = scmp.ne.s32.totalorder %s28, %s31
      %p37 = scmp.eq.s32.totalorder %s18, 0
      %p38 = por %p36, %p37
      %p39 = scmp.ne.s32.totalorder %s28, %s31
      %p40 = scmp.eq.s32.totalorder %s23, 1
      %p41 = por %p39, %p40
      %p42 = scmp.ne.s32.totalorder %s31, %s32
      %p43 = scmp.eq.s32.totalorder %s23, 0
      %p44 = por %p42, %p43
      %p45 = scmp.ne.s32.totalorder %s31, %s32
      %p46 = scmp.eq.s32.totalorder %s24, 1
      %p47 = por %p45, %p46
      %p49 = scmp.ne.s32.totalorder %s32, %s48
      %p50 = scmp.eq.s32.totalorder %s24, 0
      %p51 = por %p49, %p50
      %s53 = sadd.s32 %s52, 1
      %p56 = scmp.eq.s32.totalorder %s18, 1
      %p57 = scmp.ne.s32.totalorder %s52, %s54
      %p58 = scmp.eq.s32.totalorder %s18, 0
      %p59 = por %p57, %p58
      %p60 = scmp.ne.s32.totalorder %s52, %s54
      %p61 = scmp.eq.s32.totalorder %s23, 1
      %p62 = por %p60, %p61
      %p63 = scmp.ne.s32.totalorder %s54, %s55
      %p64 = scmp.eq.s32.totalorder %s23, 0
      %p65 = por %p63, %p64
      %p66 = scmp.ne.s32.totalorder %s54, %s55
      %p67 = scmp.eq.s32.totalorder %s24, 1
      %p68 = por %p66, %p67
      %p70 = scmp.ne.s32.totalorder %s55, %s69
      %p71 = scmp.eq.s32.totalorder %s24, 0
      %p72 = por %p70, %p71
      %s74 = sadd.s32 %s73, 1
      %p77 = scmp.eq.s32.totalorder %s18, 1
      %p78 = scmp.ne.s32.totalorder %s73, %s75
      %p79 = scmp.eq.s32.totalorder %s18, 0
      %p80 = por %p78, %p79
      %p81 = scmp.ne.s32.totalorder %s73, %s75
      %p82 = scmp.eq.s32.totalorder %s23, 1
      %p83 = por %p81, %p82
      %p84 = scmp.ne.s32.totalorder %s75, %s76
      %p85 = scmp.eq.s32.totalorder %s23, 0
      %p86 = por %p84, %p85
      %p87 = scmp.ne.s32.totalorder %s75, %s76
      %p88 = scmp.eq.s32.totalorder %s24, 1
      %p89 = por %p87, %p88
      %p91 = scmp.ne.s32.totalorder %s76, %s90
      %p92 = scmp.eq.s32.totalorder %s24, 0
      %p93 = por %p91, %p92
      %s95 = sadd.s32 %s94, 1
      %p98 = scmp.eq.s32.totalorder %s18, 1
      %p99 = scmp.ne.s32.totalorder %s94, %s96
      %p100 = scmp.eq.s32.totalorder %s18, 0
      %p101 = por %p99, %p100
      %p102 = scmp.ne.s32.totalorder %s94, %s96
      %p103 = scmp.eq.s32.totalorder %s23, 1
      %p104 = por %p102, %p103
      %p105 = scmp.ne.s32.totalorder %s96, %s97
      %p106 = scmp.eq.s32.totalorder %s23, 0
      %p107 = por %p105, %p106
      %p108 = scmp.ne.s32.totalorder %s96, %s97
      %p109 = scmp.eq.s32.totalorder %s24, 1
      %p110 = por %p108, %p109
      %p112 = scmp.ne.s32.totalorder %s97, %s111
      %p113 = scmp.eq.s32.totalorder %s24, 0
      %p114 = por %p112, %p113
      %s116 = sadd.s32 %s115, 1
      %p119 = scmp.eq.s32.totalorder %s18, 1
      %p120 = scmp.ne.s32.totalorder %s115, %s117
      %p121 = scmp.eq.s32.totalorder %s18, 0
      %p122 = por %p120, %p121
      %p123 = scmp.ne.s32.totalorder %s115, %s117
      %p124 = scmp.eq.s32.totalorder %s23, 1
      %p125 = por %p123, %p124
      %p126 = scmp.ne.s32.totalorder %s117, %s118
      %p127 = scmp.eq.s32.totalorder %s23, 0
      %p128 = por %p126, %p127
      %p129 = scmp.ne.s32.totalorder %s117, %s118
      %p130 = scmp.eq.s32.totalorder %s24, 1
      %p131 = por %p129, %p130
      %p133 = scmp.ne.s32.totalorder %s118, %s132
      %p134 = scmp.eq.s32.totalorder %s24, 0
      %p135 = por %p133, %p134
      %s136 = ssub.s32 %s18, %s25
      %p137 = scmp.eq.s32.totalorder %s136, 0
      %s139 = sadd.s32 %s138, 1
      %s140 = scalar_select %p137, %s138, %s139
      %p143 = pneg %p137
      %p144 = scmp.eq.s32.totalorder %s18, 1
      %p145 = por %p143, %p144
      %p146 = scmp.ne.s32.totalorder %s138, %s141
      %p147 = scmp.eq.s32.totalorder %s18, 0
      %p148 = por %p146, %p147
      %p149 = scmp.ne.s32.totalorder %s138, %s141
      %p150 = scmp.eq.s32.totalorder %s23, 1
      %p151 = por %p149, %p150
      %p152 = scmp.ne.s32.totalorder %s141, %s142
      %p153 = scmp.eq.s32.totalorder %s23, 0
      %p154 = por %p152, %p153
      %p155 = scmp.ne.s32.totalorder %s141, %s142
      %p156 = scmp.eq.s32.totalorder %s24, 1
      %p157 = por %p155, %p156
      %p159 = scmp.ne.s32.totalorder %s142, %s158
      %p160 = scmp.eq.s32.totalorder %s24, 0
      %p161 = por %p159, %p160
      %p162 = scmp.le.s32.totalorder 1, %s18
      %p163 = scmp.lt.s32.totalorder %s18, 3
      %p164 = pnand %p162, %p163
      %p165 = pneg %p164
      // Predicated region
      $region9: #{tpu_custom_call.1} parent=5 // pred_check
        _
      $region10: #{tpu_custom_call.1} parent=5 // pred_check_branch
        %167 = sbr.rel (%p164) target = $region12
      $region11: #{tpu_custom_call.1} parent=5 // pred_region
        %s168 = ssub.s32 %s18, 1
        // Predicated region
        $region13: #{tpu_custom_call.1} parent=11 // pred_check
          %p169 = pneg %p65
        $region14: #{tpu_custom_call.1} parent=11 // pred_check_branch
          %171 = sbr.rel (%p169) target = $region16
        $region15: #{tpu_custom_call.1} parent=11 // pred_region
          %s173 = ssub.s32 256, 256
          %174 = vsyncadd [#allocation8], %s173
          %s175 = sshll.u32 [#allocation7], 4
          %s176 = int_to_ptr.vmem [resolvable:$true] %s175
          %181 = dma.hbm_to_vmem [thread:$0]  %s1, 256, %s176, [#allocation8], 64, 64, 4
        $region16: #{tpu_custom_call.1} parent=11 // pred_fallthru
          _
        // Predicated region
        $region17: #{tpu_custom_call.1} parent=11 // pred_check
          %p182 = pneg %p86
        $region18: #{tpu_custom_call.1} parent=11 // pred_check_branch
          %184 = sbr.rel (%p182) target = $region20
        $region19: #{tpu_custom_call.1} parent=11 // pred_region
          _
        $region20: #{tpu_custom_call.1} parent=11 // pred_fallthru
          _
        // Predicated region
        $region21: #{tpu_custom_call.1} parent=11 // pred_check
          %p185 = pneg %p107
        $region22: #{tpu_custom_call.1} parent=11 // pred_check_branch
          %187 = sbr.rel (%p185) target = $region24
        $region23: #{tpu_custom_call.1} parent=11 // pred_region
          %s189 = ssub.s32 256, 256
          %190 = vsyncadd [#allocation8], %s189
          %s191 = sshll.u32 [#allocation9], 4
          %s192 = int_to_ptr.vmem [resolvable:$true] %s191
          %197 = dma.hbm_to_vmem [thread:$0]  %s3, 256, %s192, [#allocation8], 64, 64, 4
        $region24: #{tpu_custom_call.1} parent=11 // pred_fallthru
          _
        // Predicated region
        $region25: #{tpu_custom_call.1} parent=11 // pred_check
          %p198 = pneg %p128
        $region26: #{tpu_custom_call.1} parent=11 // pred_check_branch
          %200 = sbr.rel (%p198) target = $region28
        $region27: #{tpu_custom_call.1} parent=11 // pred_region
          _
        $region28: #{tpu_custom_call.1} parent=11 // pred_fallthru
          _
      $region12: #{tpu_custom_call.1} parent=5 // pred_fallthru
        _
      %p201 = scmp.lt.s32.totalorder %s18, 2
      // Predicated region
      $region29: #{tpu_custom_call.1} parent=5 // pred_check
        %p202 = pneg %p201
      $region30: #{tpu_custom_call.1} parent=5 // pred_check_branch
        %204 = sbr.rel (%p202) target = $region32
      $region31: #{tpu_custom_call.1} parent=5 // pred_region
        // Predicated region
        $region33: #{tpu_custom_call.1} parent=31 // pred_check
          %p205 = pneg %p38
        $region34: #{tpu_custom_call.1} parent=31 // pred_check_branch
          %207 = sbr.rel (%p205) target = $region36
        $region35: #{tpu_custom_call.1} parent=31 // pred_region
          %s208 = sand.u32 %s28, 1
          %s209 = scalar_lea.sflag [#allocation5], %s208
          %s210 = sand.u32 %s28, 1
          %s211 = smul.addr %s210, 8
          %s212 = scalar_lea.vmem [#allocation4], %s211
          %s214 = ssub.s32 128, 128
          %215 = vsyncadd %s209, %s214
          %s216 = smul.addr %s18, 128
          %s217 = scalar_lea.hbm %s0, %s216
          %s219 = sshll.u32 %s212, 4
          %s220 = int_to_ptr.vmem [resolvable:$true] %s219
          %222 = dma.hbm_to_vmem [thread:$0]  %s217, 128, %s220, %s209
        $region36: #{tpu_custom_call.1} parent=31 // pred_fallthru
          _
      $region32: #{tpu_custom_call.1} parent=5 // pred_fallthru
        _
      %p223 = scmp.le.s32.totalorder 1, %s18
      %p224 = scmp.lt.s32.totalorder %s18, 3
      %p225 = pnand %p223, %p224
      %p226 = pneg %p225
      // Predicated region
      $region37: #{tpu_custom_call.1} parent=5 // pred_check
        _
      $region38: #{tpu_custom_call.1} parent=5 // pred_check_branch
        %228 = sbr.rel (%p225) target = $region40
      $region39: #{tpu_custom_call.1} parent=5 // pred_region
        %s229 = ssub.s32 %s18, 1
        %s230 = sand.u32 %s31, 1
        %s231 = scalar_lea.sflag [#allocation5], %s230
        %s232 = sand.u32 %s31, 1
        %s233 = smul.addr %s232, 8
        %s234 = scalar_lea.vmem [#allocation4], %s233
        // Predicated region
        $region41: #{tpu_custom_call.1} parent=39 // pred_check
          %p235 = pneg %p44
        $region42: #{tpu_custom_call.1} parent=39 // pred_check_branch
          %237 = sbr.rel (%p235) target = $region44
        $region43: #{tpu_custom_call.1} parent=39 // pred_region
          %238 = dma.done %s231, 128
        $region44: #{tpu_custom_call.1} parent=39 // pred_fallthru
          _
        // Predicated region
        $region45: #{tpu_custom_call.1} parent=39 // pred_check
          %p239 = pneg %p65
        $region46: #{tpu_custom_call.1} parent=39 // pred_check_branch
          %241 = sbr.rel (%p239) target = $region48
        $region47: #{tpu_custom_call.1} parent=39 // pred_region
          %242 = dma.done [#allocation8], 256
        $region48: #{tpu_custom_call.1} parent=39 // pred_fallthru
          _
        // Predicated region
        $region49: #{tpu_custom_call.1} parent=39 // pred_check
          %p243 = pneg %p107
        $region50: #{tpu_custom_call.1} parent=39 // pred_check_branch
          %245 = sbr.rel (%p243) target = $region52
        $region51: #{tpu_custom_call.1} parent=39 // pred_region
          %246 = dma.done [#allocation8], 256
        $region52: #{tpu_custom_call.1} parent=39 // pred_fallthru
          _
        %s247 = sand.u32 %s31, 1
        %s248 = scalar_lea.sflag [#allocation5], %s247
        %s249 = sand.u32 %s31, 1
        %s250 = smul.addr %s249, 8
        %s251 = scalar_lea.vmem [#allocation4], %s250
        %p252 = pneg %p44
        %p253 = pneg %p41
        %p254 = pneg %p65
        %p255 = pneg %p62
        %p256 = pneg %p86
        %p257 = pneg %p83
        %p258 = pneg %p107
        %p259 = pneg %p104
        %p260 = pneg %p128
        %p261 = pneg %p125
        %p262 = pneg %p154
        %p263 = pneg %p151
        %s264 = sand.u32 %s141, 1
        %s265 = scalar_lea.sflag [#allocation6], %s264
        %s266 = sand.u32 %s141, 1
        %s267 = smul.addr %s266, 8
        %s268 = scalar_lea.vmem [#allocation10], %s267
        %v270 = vld [vmem:[%s234] sm:$0xff]
        %v271 = vpack.c.bf16 %v270, %v270
        %v272 = vld [vmem:[#allocation7] sm:$0xf]
        %v273 = vld [vmem:[#allocation7 + $0x4] sm:$0xf]
        %v274 = vld [vmem:[#allocation7 + $0x8] sm:$0xf]
        %v275 = vld [vmem:[#allocation7 + $0xc] sm:$0xf]
        %v276 = vld [vmem:[%s2] sm:$0x1]
        %v278 = vlaneseq
        %v279 = vshrl.u32 %v278, 7
        %v280 = vsub.s32 0, %v279
        %v281 = vrot.slane %v276, %v280
        %v287 = vunpack.c.l.b16 %v272
        %v288 = vunpack.c.l.b16 %v273
        %v289 = vunpack.c.l.b16 %v274
        %v290 = vunpack.c.l.b16 %v275
        %v291 = vpack.c.b16 %v288, %v287
        %v292 = vpack.c.b16 %v290, %v289
        %vm295 = vcmask 261120
        %v297 = vsel %vm295, %v271, 0
        %299 = vmatprep.subr.bf16.mxu0 0
        %300 = vmatpush1.bf16.msra.mxu0 %v291
        %301 = vmatprep.subr.bf16.mxu0 0
        %302 = vmatpush1.bf16.msra.mxu0 %v292
        %303 = vmatprep.subr.bf16.mxu0 0
        %304 = vmatpush1.bf16.msra.mxu0 0
        %305 = vmatprep.subr.bf16.mxu0 0
        %306 = vmatpush1.bf16.msra.mxu0 0
        %307 = vmatprep.subr.bf16.mxu0 0
        %308 = vmatpush1.bf16.msra.mxu0 0
        %309 = vmatprep.subr.bf16.mxu0 0
        %310 = vmatpush1.bf16.msra.mxu0 0
        %311 = vmatprep.subr.bf16.mxu0 0
        %312 = vmatpush1.bf16.msra.mxu0 0
        %313 = vmatprep.subr.bf16.mxu0 0
        %314 = vmatpush1.bf16.msra.mxu0 0
        %315 = vmatprep.subr.bf16.mxu0 0
        %316 = vmatpush1.bf16.msra.mxu0 0
        %317 = vmatprep.subr.bf16.mxu0 0
        %318 = vmatpush1.bf16.msra.mxu0 0
        %319 = vmatprep.subr.bf16.mxu0 0
        %320 = vmatpush1.bf16.msra.mxu0 0
        %321 = vmatprep.subr.bf16.mxu0 0
        %322 = vmatpush1.bf16.msra.mxu0 0
        %323 = vmatprep.subr.bf16.mxu0 0
        %324 = vmatpush1.bf16.msra.mxu0 0
        %325 = vmatprep.subr.bf16.mxu0 0
        %326 = vmatpush1.bf16.msra.mxu0 0
        %327 = vmatprep.subr.bf16.mxu0 0
        %328 = vmatpush1.bf16.msra.mxu0 0
        %329 = vmatprep.subr.bf16.mxu0 0
        %330 = vmatpush1.bf16.msra.mxu0 0
        %331 = vmatprep.mubr.bf16.mxu0 0
        %332 = vmatmul.mubr.bf16.gmra.mrb[0].mxu0 %v297
        %v333 = vpop.f32.mrb[0].mxu0
        %v334 = vadd.f32 %v281, %v333
        %v335 = vpop.f32.mrb[0].mxu0
        %v336 = vpop.f32.mrb[0].mxu0
        %v337 = vpop.f32.mrb[0].mxu0
        %338 = vdwg.mxu0
        %v339 = vpack.c.bf16 %v334, %v334
        %vm340 = vcmask 781312
        %341 = vst.msk [vmem:[#allocation2] sm:$0xf] %vm340, %v339
        %v342 = vld [vmem:[#allocation2] sm:$0xf]
        %v344 = vunpack.c.l.b16 %v342
        %v345 = vpack.c.b16 %v344, %v344
        %346 = vrot.lane.b32.xlu0 %v345, 96
        %v347 = vpop.permute.xlu0 %346
        %vm348 = vcmask 64512
        %v350 = vsel %vm348, %v342, 0
        %v353 = vsel %vm348, %v347, 0
        %355 = vmatprep.subr.bf16.mxu0 0
        %356 = vmatpush1.bf16.xpose.msra.mxu0 %v353
        %357 = vmatprep.subr.bf16.mxu0 0
        %358 = vmatpush1.bf16.xpose.msra.mxu0 0
        %359 = vmatprep.subr.bf16.mxu0 0
        %360 = vmatpush1.bf16.xpose.msra.mxu0 0
        %361 = vmatprep.subr.bf16.mxu0 0
        %362 = vmatpush1.bf16.xpose.msra.mxu0 0
        %363 = vmatprep.subr.bf16.mxu0 0
        %364 = vmatpush1.bf16.xpose.msra.mxu0 0
        %365 = vmatprep.subr.bf16.mxu0 0
        %366 = vmatpush1.bf16.xpose.msra.mxu0 0
        %367 = vmatprep.subr.bf16.mxu0 0
        %368 = vmatpush1.bf16.xpose.msra.mxu0 0
        %369 = vmatprep.subr.bf16.mxu0 0
        %370 = vmatpush1.bf16.xpose.msra.mxu0 0
        %371 = vmatprep.subr.bf16.mxu0 0
        %372 = vmatpush1.bf16.xpose.msra.mxu0 0
        %373 = vmatprep.subr.bf16.mxu0 0
        %374 = vmatpush1.bf16.xpose.msra.mxu0 0
        %375 = vmatprep.subr.bf16.mxu0 0
        %376 = vmatpush1.bf16.xpose.msra.mxu0 0
        %377 = vmatprep.subr.bf16.mxu0 0
        %378 = vmatpush1.bf16.xpose.msra.mxu0 0
        %379 = vmatprep.subr.bf16.mxu0 0
        %380 = vmatpush1.bf16.xpose.msra.mxu0 0
        %381 = vmatprep.subr.bf16.mxu0 0
        %382 = vmatpush1.bf16.xpose.msra.mxu0 0
        %383 = vmatprep.subr.bf16.mxu0 0
        %384 = vmatpush1.bf16.xpose.msra.mxu0 0
        %385 = vmatprep.subr.bf16.mxu0 0
        %386 = vmatpush1.bf16.xpose.msra.mxu0 0
        %387 = vmatprep.mubr.bf16.mxu0 0
        %388 = vmatmul.mubr.bf16.gmra.mrb[0].mxu0 %v350
        %v389 = vpop.f32.mrb[0].mxu0
        %v390 = vadd.f32 0.0, %v389
        %v391 = vpop.f32.mrb[0].mxu0
        %v392 = vpop.f32.mrb[0].mxu0
        %v393 = vpop.f32.mrb[0].mxu0
        %394 = vdwg.mxu0
        %v395 = vsel %vm348, %v390, -inf
        %396 = vmax.xlane.f32.xlu0 %v395
        %v397 = vpop.xlane.xlu0 %396
        %v398 = vsub.f32 %v390, %v397
        %v399 = vmul.f32 %v398, 1.442695
        %v400 = vpow.pop %v399
        %v401 = vsel %vm348, %v400, 0.0
        %402 = vadd.xlane.f32.xlu0 %v401
        %v403 = vpop.xlane.xlu0 %402
        %v404 = vrcp.pop %v403
        %v405 = vmul.f32 %v400, %v404
        %v406 = vpack.c.bf16 %v405, %v405
        %407 = vrot.lane.b32.xlu0 %v345, 64
        %v408 = vpop.permute.xlu0 %407
        %v410 = vsel %vm348, %v406, 0
        %vm412 = vcmask 1043456
        %v414 = vsel %vm412, %v408, 0
        %416 = vmatprep.subr.bf16.mxu0 0
        %417 = vmatpush1.bf16.msra.mxu0 %v414
        %418 = vmatprep.subr.bf16.mxu0 0
        %419 = vmatpush1.bf16.msra.mxu0 0
        %420 = vmatprep.subr.bf16.mxu0 0
        %421 = vmatpush1.bf16.msra.mxu0 0
        %422 = vmatprep.subr.bf16.mxu0 0
        %423 = vmatpush1.bf16.msra.mxu0 0
        %424 = vmatprep.subr.bf16.mxu0 0
        %425 = vmatpush1.bf16.msra.mxu0 0
        %426 = vmatprep.subr.bf16.mxu0 0
        %427 = vmatpush1.bf16.msra.mxu0 0
        %428 = vmatprep.subr.bf16.mxu0 0
        %429 = vmatpush1.bf16.msra.mxu0 0
        %430 = vmatprep.subr.bf16.mxu0 0
        %431 = vmatpush1.bf16.msra.mxu0 0
        %432 = vmatprep.subr.bf16.mxu0 0
        %433 = vmatpush1.bf16.msra.mxu0 0
        %434 = vmatprep.subr.bf16.mxu0 0
        %435 = vmatpush1.bf16.msra.mxu0 0
        %436 = vmatprep.subr.bf16.mxu0 0
        %437 = vmatpush1.bf16.msra.mxu0 0
        %438 = vmatprep.subr.bf16.mxu0 0
        %439 = vmatpush1.bf16.msra.mxu0 0
        %440 = vmatprep.subr.bf16.mxu0 0
        %441 = vmatpush1.bf16.msra.mxu0 0
        %442 = vmatprep.subr.bf16.mxu0 0
        %443 = vmatpush1.bf16.msra.mxu0 0
        %444 = vmatprep.subr.bf16.mxu0 0
        %445 = vmatpush1.bf16.msra.mxu0 0
        %446 = vmatprep.subr.bf16.mxu0 0
        %447 = vmatpush1.bf16.msra.mxu0 0
        %448 = vmatprep.mubr.bf16.mxu0 0
        %449 = vmatmul.mubr.bf16.gmra.mrb[0].mxu0 %v410
        %v450 = vpop.f32.mrb[0].mxu0
        %v451 = vadd.f32 0.0, %v450
        %v452 = vpop.f32.mrb[0].mxu0
        %v453 = vpop.f32.mrb[0].mxu0
        %v454 = vpop.f32.mrb[0].mxu0
        %455 = vdwg.mxu0
        %v456 = vpack.c.bf16 %v451, %v451
        %vm457 = vcmask 60416
        %458 = vst.msk [vmem:[#allocation3] sm:$0xf] %vm457, %v456
        %v459 = vld [vmem:[#allocation2] sm:$0xf]
        %v461 = vunpack.c.l.b16 %v459
        %v462 = vpack.c.b16 %v461, %v461
        %463 = vrot.lane.b32.xlu0 %v462, 120
        %v464 = vpop.permute.xlu0 %463
        %465 = vrot.lane.b32.xlu0 %v462, 88
        %v466 = vpop.permute.xlu0 %465
        %v468 = vsel %vm348, %v464, 0
        %v471 = vsel %vm348, %v466, 0
        %473 = vmatprep.subr.bf16.mxu0 0
        %474 = vmatpush1.bf16.xpose.msra.mxu0 %v471
        %475 = vmatprep.subr.bf16.mxu0 0
        %476 = vmatpush1.bf16.xpose.msra.mxu0 0
        %477 = vmatprep.subr.bf16.mxu0 0
        %478 = vmatpush1.bf16.xpose.msra.mxu0 0
        %479 = vmatprep.subr.bf16.mxu0 0
        %480 = vmatpush1.bf16.xpose.msra.mxu0 0
        %481 = vmatprep.subr.bf16.mxu0 0
        %482 = vmatpush1.bf16.xpose.msra.mxu0 0
        %483 = vmatprep.subr.bf16.mxu0 0
        %484 = vmatpush1.bf16.xpose.msra.mxu0 0
        %485 = vmatprep.subr.bf16.mxu0 0
        %486 = vmatpush1.bf16.xpose.msra.mxu0 0
        %487 = vmatprep.subr.bf16.mxu0 0
        %488 = vmatpush1.bf16.xpose.msra.mxu0 0
        %489 = vmatprep.subr.bf16.mxu0 0
        %490 = vmatpush1.bf16.xpose.msra.mxu0 0
        %491 = vmatprep.subr.bf16.mxu0 0
        %492 = vmatpush1.bf16.xpose.msra.mxu0 0
        %493 = vmatprep.subr.bf16.mxu0 0
        %494 = vmatpush1.bf16.xpose.msra.mxu0 0
        %495 = vmatprep.subr.bf16.mxu0 0
        %496 = vmatpush1.bf16.xpose.msra.mxu0 0
        %497 = vmatprep.subr.bf16.mxu0 0
        %498 = vmatpush1.bf16.xpose.msra.mxu0 0
        %499 = vmatprep.subr.bf16.mxu0 0
        %500 = vmatpush1.bf16.xpose.msra.mxu0 0
        %501 = vmatprep.subr.bf16.mxu0 0
        %502 = vmatpush1.bf16.xpose.msra.mxu0 0
        %503 = vmatprep.subr.bf16.mxu0 0
        %504 = vmatpush1.bf16.xpose.msra.mxu0 0
        %505 = vmatprep.mubr.bf16.mxu0 0
        %506 = vmatmul.mubr.bf16.gmra.mrb[0].mxu0 %v468
        %v507 = vpop.f32.mrb[0].mxu0
        %v508 = vadd.f32 0.0, %v507
        %v509 = vpop.f32.mrb[0].mxu0
        %v510 = vpop.f32.mrb[0].mxu0
        %v511 = vpop.f32.mrb[0].mxu0
        %512 = vdwg.mxu0
        %v513 = vsel %vm348, %v508, -inf
        %514 = vmax.xlane.f32.xlu0 %v513
        %v515 = vpop.xlane.xlu0 %514
        %v516 = vsub.f32 %v508, %v515
        %v517 = vmul.f32 %v516, 1.442695
        %v518 = vpow.pop %v517
        %v519 = vsel %vm348, %v518, 0.0
        %520 = vadd.xlane.f32.xlu0 %v519
        %v521 = vpop.xlane.xlu0 %520
        %v522 = vrcp.pop %v521
        %v523 = vmul.f32 %v518, %v522
        %v524 = vpack.c.bf16 %v523, %v523
        %525 = vrot.lane.b32.xlu0 %v462, 56
        %v526 = vpop.permute.xlu0 %525
        %v528 = vsel %vm348, %v524, 0
        %v531 = vsel %vm412, %v526, 0
        %533 = vmatprep.subr.bf16.mxu0 0
        %534 = vmatpush1.bf16.msra.mxu0 %v531
        %535 = vmatprep.subr.bf16.mxu0 0
        %536 = vmatpush1.bf16.msra.mxu0 0
        %537 = vmatprep.subr.bf16.mxu0 0
        %538 = vmatpush1.bf16.msra.mxu0 0
        %539 = vmatprep.subr.bf16.mxu0 0
        %540 = vmatpush1.bf16.msra.mxu0 0
        %541 = vmatprep.subr.bf16.mxu0 0
        %542 = vmatpush1.bf16.msra.mxu0 0
        %543 = vmatprep.subr.bf16.mxu0 0
        %544 = vmatpush1.bf16.msra.mxu0 0
        %545 = vmatprep.subr.bf16.mxu0 0
        %546 = vmatpush1.bf16.msra.mxu0 0
        %547 = vmatprep.subr.bf16.mxu0 0
        %548 = vmatpush1.bf16.msra.mxu0 0
        %549 = vmatprep.subr.bf16.mxu0 0
        %550 = vmatpush1.bf16.msra.mxu0 0
        %551 = vmatprep.subr.bf16.mxu0 0
        %552 = vmatpush1.bf16.msra.mxu0 0
        %553 = vmatprep.subr.bf16.mxu0 0
        %554 = vmatpush1.bf16.msra.mxu0 0
        %555 = vmatprep.subr.bf16.mxu0 0
        %556 = vmatpush1.bf16.msra.mxu0 0
        %557 = vmatprep.subr.bf16.mxu0 0
        %558 = vmatpush1.bf16.msra.mxu0 0
        %559 = vmatprep.subr.bf16.mxu0 0
        %560 = vmatpush1.bf16.msra.mxu0 0
        %561 = vmatprep.subr.bf16.mxu0 0
        %562 = vmatpush1.bf16.msra.mxu0 0
        %563 = vmatprep.subr.bf16.mxu0 0
        %564 = vmatpush1.bf16.msra.mxu0 0
        %565 = vmatprep.mubr.bf16.mxu0 0
        %566 = vmatmul.mubr.bf16.gmra.mrb[0].mxu0 %v528
        %v567 = vpop.f32.mrb[0].mxu0
        %v568 = vadd.f32 0.0, %v567
        %v569 = vpop.f32.mrb[0].mxu0
        %v570 = vpop.f32.mrb[0].mxu0
        %v571 = vpop.f32.mrb[0].mxu0
        %572 = vdwg.mxu0
        %v573 = vpack.c.bf16 %v568, %v568
        %v575 = vunpack.c.l.b16 %v573
        %v576 = vpack.c.b16 %v575, %v575
        %577 = vrot.lane.b32.xlu0 %v576, 8
        %v578 = vpop.permute.xlu0 %577
        %vm580 = vcmask 126016
        %581 = vst.msk [vmem:[#allocation3] sm:$0xf] %vm580, %v578
        %v582 = vld [vmem:[#allocation2] sm:$0xf]
        %v584 = vunpack.c.l.b16 %v582
        %v585 = vpack.c.b16 %v584, %v584
        %586 = vrot.lane.b32.xlu0 %v585, 112
        %v587 = vpop.permute.xlu0 %586
        %588 = vrot.lane.b32.xlu0 %v585, 80
        %v589 = vpop.permute.xlu0 %588
        %v591 = vsel %vm348, %v587, 0
        %v594 = vsel %vm348, %v589, 0
        %596 = vmatprep.subr.bf16.mxu0 0
        %597 = vmatpush1.bf16.xpose.msra.mxu0 %v594
        %598 = vmatprep.subr.bf16.mxu0 0
        %599 = vmatpush1.bf16.xpose.msra.mxu0 0
        %600 = vmatprep.subr.bf16.mxu0 0
        %601 = vmatpush1.bf16.xpose.msra.mxu0 0
        %602 = vmatprep.subr.bf16.mxu0 0
        %603 = vmatpush1.bf16.xpose.msra.mxu0 0
        %604 = vmatprep.subr.bf16.mxu0 0
        %605 = vmatpush1.bf16.xpose.msra.mxu0 0
        %606 = vmatprep.subr.bf16.mxu0 0
        %607 = vmatpush1.bf16.xpose.msra.mxu0 0
        %608 = vmatprep.subr.bf16.mxu0 0
        %609 = vmatpush1.bf16.xpose.msra.mxu0 0
        %610 = vmatprep.subr.bf16.mxu0 0
        %611 = vmatpush1.bf16.xpose.msra.mxu0 0
        %612 = vmatprep.subr.bf16.mxu0 0
        %613 = vmatpush1.bf16.xpose.msra.mxu0 0
        %614 = vmatprep.subr.bf16.mxu0 0
        %615 = vmatpush1.bf16.xpose.msra.mxu0 0
        %616 = vmatprep.subr.bf16.mxu0 0
        %617 = vmatpush1.bf16.xpose.msra.mxu0 0
        %618 = vmatprep.subr.bf16.mxu0 0
        %619 = vmatpush1.bf16.xpose.msra.mxu0 0
        %620 = vmatprep.subr.bf16.mxu0 0
        %621 = vmatpush1.bf16.xpose.msra.mxu0 0
        %622 = vmatprep.subr.bf16.mxu0 0
        %623 = vmatpush1.bf16.xpose.msra.mxu0 0
        %624 = vmatprep.subr.bf16.mxu0 0
        %625 = vmatpush1.bf16.xpose.msra.mxu0 0
        %626 = vmatprep.subr.bf16.mxu0 0
        %627 = vmatpush1.bf16.xpose.msra.mxu0 0
        %628 = vmatprep.mubr.bf16.mxu0 0
        %629 = vmatmul.mubr.bf16.gmra.mrb[0].mxu0 %v591
        %v630 = vpop.f32.mrb[0].mxu0
        %v631 = vadd.f32 0.0, %v630
        %v632 = vpop.f32.mrb[0].mxu0
        %v633 = vpop.f32.mrb[0].mxu0
        %v634 = vpop.f32.mrb[0].mxu0
        %635 = vdwg.mxu0
        %v636 = vsel %vm348, %v631, -inf
        %637 = vmax.xlane.f32.xlu0 %v636
        %v638 = vpop.xlane.xlu0 %637
        %v639 = vsub.f32 %v631, %v638
        %v640 = vmul.f32 %v639, 1.442695
        %v641 = vpow.pop %v640
        %v642 = vsel %vm348, %v641, 0.0
        %643 = vadd.xlane.f32.xlu0 %v642
        %v644 = vpop.xlane.xlu0 %643
        %v645 = vrcp.pop %v644
        %v646 = vmul.f32 %v641, %v645
        %v647 = vpack.c.bf16 %v646, %v646
        %648 = vrot.lane.b32.xlu0 %v585, 48
        %v649 = vpop.permute.xlu0 %648
        %v651 = vsel %vm348, %v647, 0
        %v654 = vsel %vm412, %v649, 0
        %656 = vmatprep.subr.bf16.mxu0 0
        %657 = vmatpush1.bf16.msra.mxu0 %v654
        %658 = vmatprep.subr.bf16.mxu0 0
        %659 = vmatpush1.bf16.msra.mxu0 0
        %660 = vmatprep.subr.bf16.mxu0 0
        %661 = vmatpush1.bf16.msra.mxu0 0
        %662 = vmatprep.subr.bf16.mxu0 0
        %663 = vmatpush1.bf16.msra.mxu0 0
        %664 = vmatprep.subr.bf16.mxu0 0
        %665 = vmatpush1.bf16.msra.mxu0 0
        %666 = vmatprep.subr.bf16.mxu0 0
        %667 = vmatpush1.bf16.msra.mxu0 0
        %668 = vmatprep.subr.bf16.mxu0 0
        %669 = vmatpush1.bf16.msra.mxu0 0
        %670 = vmatprep.subr.bf16.mxu0 0
        %671 = vmatpush1.bf16.msra.mxu0 0
        %672 = vmatprep.subr.bf16.mxu0 0
        %673 = vmatpush1.bf16.msra.mxu0 0
        %674 = vmatprep.subr.bf16.mxu0 0
        %675 = vmatpush1.bf16.msra.mxu0 0
        %676 = vmatprep.subr.bf16.mxu0 0
        %677 = vmatpush1.bf16.msra.mxu0 0
        %678 = vmatprep.subr.bf16.mxu0 0
        %679 = vmatpush1.bf16.msra.mxu0 0
        %680 = vmatprep.subr.bf16.mxu0 0
        %681 = vmatpush1.bf16.msra.mxu0 0
        %682 = vmatprep.subr.bf16.mxu0 0
        %683 = vmatpush1.bf16.msra.mxu0 0
        %684 = vmatprep.subr.bf16.mxu0 0
        %685 = vmatpush1.bf16.msra.mxu0 0
        %686 = vmatprep.subr.bf16.mxu0 0
        %687 = vmatpush1.bf16.msra.mxu0 0
        %688 = vmatprep.mubr.bf16.mxu0 0
        %689 = vmatmul.mubr.bf16.gmra.mrb[0].mxu0 %v651
        %v690 = vpop.f32.mrb[0].mxu0
        %v691 = vadd.f32 0.0, %v690
        %v692 = vpop.f32.mrb[0].mxu0
        %v693 = vpop.f32.mrb[0].mxu0
        %v694 = vpop.f32.mrb[0].mxu0
        %695 = vdwg.mxu0
        %v696 = vpack.c.bf16 %v691, %v691
        %v698 = vunpack.c.l.b16 %v696
        %v699 = vpack.c.b16 %v698, %v698
        %700 = vrot.lane.b32.xlu0 %v699, 16
        %v701 = vpop.permute.xlu0 %700
        %vm703 = vcmask 191616
        %704 = vst.msk [vmem:[#allocation3] sm:$0xf] %vm703, %v701
        %v705 = vld [vmem:[#allocation2] sm:$0xf]
        %v707 = vunpack.c.l.b16 %v705
        %v708 = vpack.c.b16 %v707, %v707
        %709 = vrot.lane.b32.xlu0 %v708, 104
        %v710 = vpop.permute.xlu0 %709
        %711 = vrot.lane.b32.xlu0 %v708, 72
        %v712 = vpop.permute.xlu0 %711
        %v714 = vsel %vm348, %v710, 0
        %v717 = vsel %vm348, %v712, 0
        %719 = vmatprep.subr.bf16.mxu0 0
        %720 = vmatpush1.bf16.xpose.msra.mxu0 %v717
        %721 = vmatprep.subr.bf16.mxu0 0
        %722 = vmatpush1.bf16.xpose.msra.mxu0 0
        %723 = vmatprep.subr.bf16.mxu0 0
        %724 = vmatpush1.bf16.xpose.msra.mxu0 0
        %725 = vmatprep.subr.bf16.mxu0 0
        %726 = vmatpush1.bf16.xpose.msra.mxu0 0
        %727 = vmatprep.subr.bf16.mxu0 0
        %728 = vmatpush1.bf16.xpose.msra.mxu0 0
        %729 = vmatprep.subr.bf16.mxu0 0
        %730 = vmatpush1.bf16.xpose.msra.mxu0 0
        %731 = vmatprep.subr.bf16.mxu0 0
        %732 = vmatpush1.bf16.xpose.msra.mxu0 0
        %733 = vmatprep.subr.bf16.mxu0 0
        %734 = vmatpush1.bf16.xpose.msra.mxu0 0
        %735 = vmatprep.subr.bf16.mxu0 0
        %736 = vmatpush1.bf16.xpose.msra.mxu0 0
        %737 = vmatprep.subr.bf16.mxu0 0
        %738 = vmatpush1.bf16.xpose.msra.mxu0 0
        %739 = vmatprep.subr.bf16.mxu0 0
        %740 = vmatpush1.bf16.xpose.msra.mxu0 0
        %741 = vmatprep.subr.bf16.mxu0 0
        %742 = vmatpush1.bf16.xpose.msra.mxu0 0
        %743 = vmatprep.subr.bf16.mxu0 0
        %744 = vmatpush1.bf16.xpose.msra.mxu0 0
        %745 = vmatprep.subr.bf16.mxu0 0
        %746 = vmatpush1.bf16.xpose.msra.mxu0 0
        %747 = vmatprep.subr.bf16.mxu0 0
        %748 = vmatpush1.bf16.xpose.msra.mxu0 0
        %749 = vmatprep.subr.bf16.mxu0 0
        %750 = vmatpush1.bf16.xpose.msra.mxu0 0
        %751 = vmatprep.mubr.bf16.mxu0 0
        %752 = vmatmul.mubr.bf16.gmra.mrb[0].mxu0 %v714
        %v753 = vpop.f32.mrb[0].mxu0
        %v754 = vadd.f32 0.0, %v753
        %v755 = vpop.f32.mrb[0].mxu0
        %v756 = vpop.f32.mrb[0].mxu0
        %v757 = vpop.f32.mrb[0].mxu0
        %758 = vdwg.mxu0
        %v759 = vsel %vm348, %v754, -inf
        %760 = vmax.xlane.f32.xlu0 %v759
        %v761 = vpop.xlane.xlu0 %760
        %v762 = vsub.f32 %v754, %v761
        %v763 = vmul.f32 %v762, 1.442695
        %v764 = vpow.pop %v763
        %v765 = vsel %vm348, %v764, 0.0
        %766 = vadd.xlane.f32.xlu0 %v765
        %v767 = vpop.xlane.xlu0 %766
        %v768 = vrcp.pop %v767
        %v769 = vmul.f32 %v764, %v768
        %v770 = vpack.c.bf16 %v769, %v769
        %771 = vrot.lane.b32.xlu0 %v708, 40
        %v772 = vpop.permute.xlu0 %771
        %v774 = vsel %vm348, %v770, 0
        %v777 = vsel %vm412, %v772, 0
        %779 = vmatprep.subr.bf16.mxu0 0
        %780 = vmatpush1.bf16.msra.mxu0 %v777
        %781 = vmatprep.subr.bf16.mxu0 0
        %782 = vmatpush1.bf16.msra.mxu0 0
        %783 = vmatprep.subr.bf16.mxu0 0
        %784 = vmatpush1.bf16.msra.mxu0 0
        %785 = vmatprep.subr.bf16.mxu0 0
        %786 = vmatpush1.bf16.msra.mxu0 0
        %787 = vmatprep.subr.bf16.mxu0 0
        %788 = vmatpush1.bf16.msra.mxu0 0
        %789 = vmatprep.subr.bf16.mxu0 0
        %790 = vmatpush1.bf16.msra.mxu0 0
        %791 = vmatprep.subr.bf16.mxu0 0
        %792 = vmatpush1.bf16.msra.mxu0 0
        %793 = vmatprep.subr.bf16.mxu0 0
        %794 = vmatpush1.bf16.msra.mxu0 0
        %795 = vmatprep.subr.bf16.mxu0 0
        %796 = vmatpush1.bf16.msra.mxu0 0
        %797 = vmatprep.subr.bf16.mxu0 0
        %798 = vmatpush1.bf16.msra.mxu0 0
        %799 = vmatprep.subr.bf16.mxu0 0
        %800 = vmatpush1.bf16.msra.mxu0 0
        %801 = vmatprep.subr.bf16.mxu0 0
        %802 = vmatpush1.bf16.msra.mxu0 0
        %803 = vmatprep.subr.bf16.mxu0 0
        %804 = vmatpush1.bf16.msra.mxu0 0
        %805 = vmatprep.subr.bf16.mxu0 0
        %806 = vmatpush1.bf16.msra.mxu0 0
        %807 = vmatprep.subr.bf16.mxu0 0
        %808 = vmatpush1.bf16.msra.mxu0 0
        %809 = vmatprep.subr.bf16.mxu0 0
        %810 = vmatpush1.bf16.msra.mxu0 0
        %811 = vmatprep.mubr.bf16.mxu0 0
        %812 = vmatmul.mubr.bf16.gmra.mrb[0].mxu0 %v774
        %v813 = vpop.f32.mrb[0].mxu0
        %v814 = vadd.f32 0.0, %v813
        %v815 = vpop.f32.mrb[0].mxu0
        %v816 = vpop.f32.mrb[0].mxu0
        %v817 = vpop.f32.mrb[0].mxu0
        %818 = vdwg.mxu0
        %v819 = vpack.c.bf16 %v814, %v814
        %v821 = vunpack.c.l.b16 %v819
        %v822 = vpack.c.b16 %v821, %v821
        %823 = vrot.lane.b32.xlu0 %v822, 24
        %v824 = vpop.permute.xlu0 %823
        %vm826 = vcmask 257216
        %827 = vst.msk [vmem:[#allocation3] sm:$0xf] %vm826, %v824
        %v828 = vld [vmem:[%s4] sm:$0x1]
        %v829 = vld [vmem:[%s4 + $0x1] sm:$0x1]
        %v830 = vld [vmem:[%s4 + $0x2] sm:$0x1]
        %v831 = vld [vmem:[#allocation3] sm:$0xf]
        %v832 = vld [vmem:[#allocation9] sm:$0xf]
        %v833 = vld [vmem:[#allocation9 + $0x4] sm:$0xf]
        %v834 = vld [vmem:[#allocation9 + $0x8] sm:$0xf]
        %v835 = vld [vmem:[#allocation9 + $0xc] sm:$0xf]
        %v836 = vlaneseq
        %v837 = vshrl.u32 %v836, 7
        %v838 = vsub.s32 0, %v837
        %v839 = vrot.slane %v828, %v838
        %v844 = vunpack.c.l.b16 %v832
        %v845 = vunpack.c.l.b16 %v833
        %v846 = vunpack.c.l.b16 %v834
        %v847 = vunpack.c.l.b16 %v835
        %v848 = vpack.c.b16 %v845, %v844
        %v849 = vpack.c.b16 %v847, %v846
        %v853 = vsel %vm295, %v831, 0
        %855 = vmatprep.subr.bf16.mxu0 0
        %856 = vmatpush1.bf16.msra.mxu0 %v848
        %857 = vmatprep.subr.bf16.mxu0 0
        %858 = vmatpush1.bf16.msra.mxu0 %v849
        %859 = vmatprep.subr.bf16.mxu0 0
        %860 = vmatpush1.bf16.msra.mxu0 0
        %861 = vmatprep.subr.bf16.mxu0 0
        %862 = vmatpush1.bf16.msra.mxu0 0
        %863 = vmatprep.subr.bf16.mxu0 0
        %864 = vmatpush1.bf16.msra.mxu0 0
        %865 = vmatprep.subr.bf16.mxu0 0
        %866 = vmatpush1.bf16.msra.mxu0 0
        %867 = vmatprep.subr.bf16.mxu0 0
        %868 = vmatpush1.bf16.msra.mxu0 0
        %869 = vmatprep.subr.bf16.mxu0 0
        %870 = vmatpush1.bf16.msra.mxu0 0
        %871 = vmatprep.subr.bf16.mxu0 0
        %872 = vmatpush1.bf16.msra.mxu0 0
        %873 = vmatprep.subr.bf16.mxu0 0
        %874 = vmatpush1.bf16.msra.mxu0 0
        %875 = vmatprep.subr.bf16.mxu0 0
        %876 = vmatpush1.bf16.msra.mxu0 0
        %877 = vmatprep.subr.bf16.mxu0 0
        %878 = vmatpush1.bf16.msra.mxu0 0
        %879 = vmatprep.subr.bf16.mxu0 0
        %880 = vmatpush1.bf16.msra.mxu0 0
        %881 = vmatprep.subr.bf16.mxu0 0
        %882 = vmatpush1.bf16.msra.mxu0 0
        %883 = vmatprep.subr.bf16.mxu0 0
        %884 = vmatpush1.bf16.msra.mxu0 0
        %885 = vmatprep.subr.bf16.mxu0 0
        %886 = vmatpush1.bf16.msra.mxu0 0
        %887 = vmatprep.mubr.bf16.mxu0 0
        %888 = vmatmul.mubr.bf16.gmra.mrb[0].mxu0 %v853
        %v889 = vpop.f32.mrb[0].mxu0
        %v890 = vadd.f32 %v839, %v889
        %v891 = vpop.f32.mrb[0].mxu0
        %v892 = vpop.f32.mrb[0].mxu0
        %v893 = vpop.f32.mrb[0].mxu0
        %894 = vdwg.mxu0
        %v895 = vadd.f32 %v270, %v890
        %v896 = vsel %vm295, %v895, 0.0
        %897 = vadd.xlane.f32.xlu0 %v896
        %v898 = vpop.xlane.xlu0 %897
        %v899 = vrcp.pop 32.0
        %v900 = vmul.f32 %v898, %v899
        %v901 = vsub.f32 %v895, %v900
        %v902 = vmul.f32 %v901, %v901
        %v903 = vsel %vm295, %v902, 0.0
        %904 = vadd.xlane.f32.xlu0 %v903
        %v905 = vpop.xlane.xlu0 %904
        %v906 = vmul.f32 %v905, %v899
        %v907 = vadd.f32 %v906, 1e-05
        %v908 = vrsqrt.pop %v907
        %v909 = vmul.f32 %v901, %v908
        %v910 = vlaneseq
        %v911 = vshrl.u32 %v910, 7
        %v912 = vsub.s32 0, %v911
        %v913 = vrot.slane %v829, %v912
        %v914 = vmul.f32 %v909, %v913
        %v915 = vlaneseq
        %v916 = vshrl.u32 %v915, 7
        %v917 = vsub.s32 0, %v916
        %v918 = vrot.slane %v830, %v917
        %v919 = vadd.f32 %v914, %v918
        %920 = vst.msk [vmem:[%s268] sm:$0xff] %vm295, %v919
        %s921 = sand.u32 %s141, 1
        %s922 = scalar_lea.sflag [#allocation6], %s921
        %s923 = sand.u32 %s141, 1
        %s924 = smul.addr %s923, 8
        %s925 = scalar_lea.vmem [#allocation10], %s924
        // Predicated region
        $region53: #{tpu_custom_call.1} parent=39 // pred_check
          %p926 = pneg %p151
        $region54: #{tpu_custom_call.1} parent=39 // pred_check_branch
          %928 = sbr.rel (%p926) target = $region56
        $region55: #{tpu_custom_call.1} parent=39 // pred_region
          %s930 = ssub.s32 128, 128
          %931 = vsyncadd %s922, %s930
          %s932 = smul.addr %s23, 128
          %s933 = scalar_lea.hbm %s5, %s932
          %s935 = sshll.u32 %s925, 4
          %s936 = int_to_ptr.vmem [resolvable:$true] %s935
          %938 = dma.vmem_to_hbm [thread:$0]  %s936, 128, %s933, %s922
        $region56: #{tpu_custom_call.1} parent=39 // pred_fallthru
          _
      $region40: #{tpu_custom_call.1} parent=5 // pred_fallthru
        _
      %p939 = scmp.le.s32.totalorder 2, %s18
      // Predicated region
      $region57: #{tpu_custom_call.1} parent=5 // pred_check
        %p940 = pneg %p939
      $region58: #{tpu_custom_call.1} parent=5 // pred_check_branch
        %942 = sbr.rel (%p940) target = $region60
      $region59: #{tpu_custom_call.1} parent=5 // pred_region
        %s943 = ssub.s32 %s18, 2
        // Predicated region
        $region61: #{tpu_custom_call.1} parent=59 // pred_check
          %p944 = pneg %p157
        $region62: #{tpu_custom_call.1} parent=59 // pred_check_branch
          %946 = sbr.rel (%p944) target = $region64
        $region63: #{tpu_custom_call.1} parent=59 // pred_region
          %s947 = sand.u32 %s142, 1
          %s948 = scalar_lea.sflag [#allocation6], %s947
          %s949 = sand.u32 %s142, 1
          %s950 = smul.addr %s949, 8
          %s951 = scalar_lea.vmem [#allocation10], %s950
          %952 = dma.done %s948, 128
        $region64: #{tpu_custom_call.1} parent=59 // pred_fallthru
          _
      $region60: #{tpu_custom_call.1} parent=5 // pred_fallthru
        _
    $region6: #{tpu_custom_call.1} parent=1 // loop_footer
      %s22 = sadd.s32 1, %s18
    $region7: #{tpu_custom_call.1} parent=1 // loop_footer_branch
      %17 = sbr.rel target = $region3
    $region8: #{tpu_custom_call.1} parent=1 // loop_exit
      _
    %953 = vsyncpa [#allocation5], 1
    %s954 = scalar_lea.sflag [#allocation5], 1
    %955 = vsyncpa %s954, 1
    %956 = vsyncpa [#allocation8], 1
    %957 = vsyncpa [#allocation6], 1
    %s958 = scalar_lea.sflag [#allocation6], 1
    %959 = vsyncpa %s958, 1

// kernel: tpu_custom_call.1
$region0: #{tpu_custom_call.1}
  #allocation0 [shape = 'u32[]', space=smem, size = 0x4, offset = 0x4, fixed_abs, tag = 'smem constant byte address 0x4 - core index']
  #allocation1 [shape = 'u32[144,128]{1,0:T(1,128)}', space=vmem, size = 0x12000, scoped, tag = 'internal scratch']
  #allocation2 [shape = 'bf16[8,96]{1,0:T(8,128)(2,1)}', space=vmem, size = 0x800, scoped, tag = 'scratch operand']
  #allocation3 [shape = 'bf16[8,32]{1,0:T(8,128)(2,1)}', space=vmem, size = 0x800, scoped, tag = 'scratch operand']
  %s0 = inlined_call_operand.hbm [shape: f32[2,8,32], index: 0, kind: input, shape index: {}]
  %s1 = inlined_call_operand.hbm [shape: bf16[32,96], index: 1, kind: input, shape index: {}]
  %s2 = inlined_call_operand.vmem [shape: f32[1,96], index: 2, kind: input, shape index: {}]
  %s3 = inlined_call_operand.hbm [shape: bf16[32,32], index: 3, kind: input, shape index: {}]
  %s4 = inlined_call_operand.vmem [shape: f32[3,32], index: 4, kind: input, shape index: {}]
  %s5 = inlined_call_operand.hbm [shape: f32[2,8,32], index: 5, kind: output, shape index: {}]
  %s6 = sld [smem:[#allocation0]]
  $region65: #{tpu_custom_call.1} parent=0
    _
  %s8 = ssub.s32 1, %s6
  %s9 = scalar_select 0, %s8, %s6
  $region1: #{tpu_custom_call.1} parent=0
    #allocation4 [shape = 'u8[8192]{0}', space=vmem, size = 0x2000, scoped, tag = 'input window, operand 0']
    #allocation5 [shape = 's32[2]{0}', space=sflag, size = 0x8, scoped, tag = 'scoped memory for tpu_custom_call.1']
    #allocation6 [shape = 's32[2]{0}', space=sflag, size = 0x8, scoped, tag = 'scoped memory for tpu_custom_call.1']
    #allocation7 [shape = 'u8[8192]{0}', space=vmem, size = 0x2000, scoped, tag = 'input window, operand 1, single buffered']
    #allocation8 [shape = 's32[1]{0}', space=sflag, size = 0x4, scoped, tag = 'scoped memory for tpu_custom_call.1']
    #allocation9 [shape = 'u8[8192]{0}', space=vmem, size = 0x2000, scoped, tag = 'input window, operand 3, single buffered']
    #allocation10 [shape = 'u8[8192]{0}', space=vmem, size = 0x2000, scoped, tag = 'output window, operand 0']
    %10 = vsyncpa [#allocation5], 0
    %s11 = scalar_lea.sflag [#allocation5], 1
    %12 = vsyncpa %s11, 0
    %13 = vsyncpa [#allocation8], 0
    %14 = vsyncpa [#allocation6], 0
    %s15 = scalar_lea.sflag [#allocation6], 1
    %16 = vsyncpa %s15, 0
    loop: start=0, step=1, limit=4
    $region2: #{tpu_custom_call.1} parent=1 // loop_pre_header
      _
    $region3: #{tpu_custom_call.1} parent=1 // loop_header
      %s18 = sphi 0, %s22
      %p19 = scmp.ge.s32.totalorder %s18, 4
      %s28 = sphi 0, %s30
      %s31 = sphi 0, %s28
      %s32 = sphi 0, %s31
      %s48 = sphi 0, %s32
      %s52 = sphi 0, %s52
      %s54 = sphi 0, %s52
      %s55 = sphi 0, %s54
      %s69 = sphi 0, %s55
      %s73 = sphi 0, %s73
      %s75 = sphi 0, %s73
      %s76 = sphi 0, %s75
      %s90 = sphi 0, %s76
      %s94 = sphi 0, %s94
      %s96 = sphi 0, %s94
      %s97 = sphi 0, %s96
      %s111 = sphi 0, %s97
      %s115 = sphi 0, %s115
      %s117 = sphi 0, %s115
      %s118 = sphi 0, %s117
      %s132 = sphi 0, %s118
      %s138 = sphi 0, %s140
      %s141 = sphi 0, %s138
      %s142 = sphi 0, %s141
      %s158 = sphi 0, %s142
    $region4: #{tpu_custom_call.1} parent=1 // loop_header_branch
      %21 = sbr.rel (%p19) target = $region8
    $region5: #{tpu_custom_call.1} parent=1 // loop_body
      %s23 = ssub.s32 %s18, 1
      %s24 = ssub.s32 %s18, 2
      %s25 = sadd.s32 %s18, 1
      %s26 = ssub.s32 %s18, %s25
      %p27 = scmp.eq.s32.totalorder %s26, 0
      %s29 = sadd.s32 %s28, 1
      %s30 = scalar_select %p27, %s28, %s29
      %p33 = pneg %p27
      %p34 = scmp.eq.s32.totalorder %s18, 1
      %p35 = por %p33, %p34
      %p36 = scmp.ne.s32.totalorder %s28, %s31
      %p37 = scmp.eq.s32.totalorder %s18, 0
      %p38 = por %p36, %p37
      %p39 = scmp.ne.s32.totalorder %s28, %s31
      %p40 = scmp.eq.s32.totalorder %s23, 1
      %p41 = por %p39, %p40
      %p42 = scmp.ne.s32.totalorder %s31, %s32
      %p43 = scmp.eq.s32.totalorder %s23, 0
      %p44 = por %p42, %p43
      %p45 = scmp.ne.s32.totalorder %s31, %s32
      %p46 = scmp.eq.s32.totalorder %s24, 1
      %p47 = por %p45, %p46
      %p49 = scmp.ne.s32.totalorder %s32, %s48
      %p50 = scmp.eq.s32.totalorder %s24, 0
      %p51 = por %p49, %p50
      %s53 = sadd.s32 %s52, 1
      %p56 = scmp.eq.s32.totalorder %s18, 1
      %p57 = scmp.ne.s32.totalorder %s52, %s54
      %p58 = scmp.eq.s32.totalorder %s18, 0
      %p59 = por %p57, %p58
      %p60 = scmp.ne.s32.totalorder %s52, %s54
      %p61 = scmp.eq.s32.totalorder %s23, 1
      %p62 = por %p60, %p61
      %p63 = scmp.ne.s32.totalorder %s54, %s55
      %p64 = scmp.eq.s32.totalorder %s23, 0
      %p65 = por %p63, %p64
      %p66 = scmp.ne.s32.totalorder %s54, %s55
      %p67 = scmp.eq.s32.totalorder %s24, 1
      %p68 = por %p66, %p67
      %p70 = scmp.ne.s32.totalorder %s55, %s69
      %p71 = scmp.eq.s32.totalorder %s24, 0
      %p72 = por %p70, %p71
      %s74 = sadd.s32 %s73, 1
      %p77 = scmp.eq.s32.totalorder %s18, 1
      %p78 = scmp.ne.s32.totalorder %s73, %s75
      %p79 = scmp.eq.s32.totalorder %s18, 0
      %p80 = por %p78, %p79
      %p81 = scmp.ne.s32.totalorder %s73, %s75
      %p82 = scmp.eq.s32.totalorder %s23, 1
      %p83 = por %p81, %p82
      %p84 = scmp.ne.s32.totalorder %s75, %s76
      %p85 = scmp.eq.s32.totalorder %s23, 0
      %p86 = por %p84, %p85
      %p87 = scmp.ne.s32.totalorder %s75, %s76
      %p88 = scmp.eq.s32.totalorder %s24, 1
      %p89 = por %p87, %p88
      %p91 = scmp.ne.s32.totalorder %s76, %s90
      %p92 = scmp.eq.s32.totalorder %s24, 0
      %p93 = por %p91, %p92
      %s95 = sadd.s32 %s94, 1
      %p98 = scmp.eq.s32.totalorder %s18, 1
      %p99 = scmp.ne.s32.totalorder %s94, %s96
      %p100 = scmp.eq.s32.totalorder %s18, 0
      %p101 = por %p99, %p100
      %p102 = scmp.ne.s32.totalorder %s94, %s96
      %p103 = scmp.eq.s32.totalorder %s23, 1
      %p104 = por %p102, %p103
      %p105 = scmp.ne.s32.totalorder %s96, %s97
      %p106 = scmp.eq.s32.totalorder %s23, 0
      %p107 = por %p105, %p106
      %p108 = scmp.ne.s32.totalorder %s96, %s97
      %p109 = scmp.eq.s32.totalorder %s24, 1
      %p110 = por %p108, %p109
      %p112 = scmp.ne.s32.totalorder %s97, %s111
      %p113 = scmp.eq.s32.totalorder %s24, 0
      %p114 = por %p112, %p113
      %s116 = sadd.s32 %s115, 1
      %p119 = scmp.eq.s32.totalorder %s18, 1
      %p120 = scmp.ne.s32.totalorder %s115, %s117
      %p121 = scmp.eq.s32.totalorder %s18, 0
      %p122 = por %p120, %p121
      %p123 = scmp.ne.s32.totalorder %s115, %s117
      %p124 = scmp.eq.s32.totalorder %s23, 1
      %p125 = por %p123, %p124
      %p126 = scmp.ne.s32.totalorder %s117, %s118
      %p127 = scmp.eq.s32.totalorder %s23, 0
      %p128 = por %p126, %p127
      %p129 = scmp.ne.s32.totalorder %s117, %s118
      %p130 = scmp.eq.s32.totalorder %s24, 1
      %p131 = por %p129, %p130
      %p133 = scmp.ne.s32.totalorder %s118, %s132
      %p134 = scmp.eq.s32.totalorder %s24, 0
      %p135 = por %p133, %p134
      %s136 = ssub.s32 %s18, %s25
      %p137 = scmp.eq.s32.totalorder %s136, 0
      %s139 = sadd.s32 %s138, 1
      %s140 = scalar_select %p137, %s138, %s139
      %p143 = pneg %p137
      %p144 = scmp.eq.s32.totalorder %s18, 1
      %p145 = por %p143, %p144
      %p146 = scmp.ne.s32.totalorder %s138, %s141
      %p147 = scmp.eq.s32.totalorder %s18, 0
      %p148 = por %p146, %p147
      %p149 = scmp.ne.s32.totalorder %s138, %s141
      %p150 = scmp.eq.s32.totalorder %s23, 1
      %p151 = por %p149, %p150
      %p152 = scmp.ne.s32.totalorder %s141, %s142
      %p153 = scmp.eq.s32.totalorder %s23, 0
      %p154 = por %p152, %p153
      %p155 = scmp.ne.s32.totalorder %s141, %s142
      %p156 = scmp.eq.s32.totalorder %s24, 1
      %p157 = por %p155, %p156
      %p159 = scmp.ne.s32.totalorder %s142, %s158
      %p160 = scmp.eq.s32.totalorder %s24, 0
      %p161 = por %p159, %p160
      %p162 = scmp.le.s32.totalorder 1, %s18
      %p163 = scmp.lt.s32.totalorder %s18, 3
      %p164 = pnand %p162, %p163
      %p165 = pneg %p164
      // Predicated region
      $region9: #{tpu_custom_call.1} parent=5 // pred_check
        _
      $region10: #{tpu_custom_call.1} parent=5 // pred_check_branch
        %167 = sbr.rel (%p164) target = $region12
      $region11: #{tpu_custom_call.1} parent=5 // pred_region
        %s168 = ssub.s32 %s18, 1
        // Predicated region
        $region13: #{tpu_custom_call.1} parent=11 // pred_check
          %p169 = pneg %p65
        $region14: #{tpu_custom_call.1} parent=11 // pred_check_branch
          %171 = sbr.rel (%p169) target = $region16
        $region15: #{tpu_custom_call.1} parent=11 // pred_region
          %s173 = ssub.s32 256, 256
          %174 = vsyncadd [#allocation8], %s173
          %s175 = sshll.u32 [#allocation7], 4
          %s176 = int_to_ptr.vmem [resolvable:$true] %s175
          %181 = dma.hbm_to_vmem [thread:$0]  %s1, 256, %s176, [#allocation8], 64, 64, 4
        $region16: #{tpu_custom_call.1} parent=11 // pred_fallthru
          _
        // Predicated region
        $region17: #{tpu_custom_call.1} parent=11 // pred_check
          %p182 = pneg %p86
        $region18: #{tpu_custom_call.1} parent=11 // pred_check_branch
          %184 = sbr.rel (%p182) target = $region20
        $region19: #{tpu_custom_call.1} parent=11 // pred_region
          _
        $region20: #{tpu_custom_call.1} parent=11 // pred_fallthru
          _
        // Predicated region
        $region21: #{tpu_custom_call.1} parent=11 // pred_check
          %p185 = pneg %p107
        $region22: #{tpu_custom_call.1} parent=11 // pred_check_branch
          %187 = sbr.rel (%p185) target = $region24
        $region23: #{tpu_custom_call.1} parent=11 // pred_region
          %s189 = ssub.s32 256, 256
          %190 = vsyncadd [#allocation8], %s189
          %s191 = sshll.u32 [#allocation9], 4
          %s192 = int_to_ptr.vmem [resolvable:$true] %s191
          %197 = dma.hbm_to_vmem [thread:$0]  %s3, 256, %s192, [#allocation8], 64, 64, 4
        $region24: #{tpu_custom_call.1} parent=11 // pred_fallthru
          _
        // Predicated region
        $region25: #{tpu_custom_call.1} parent=11 // pred_check
          %p198 = pneg %p128
        $region26: #{tpu_custom_call.1} parent=11 // pred_check_branch
          %200 = sbr.rel (%p198) target = $region28
        $region27: #{tpu_custom_call.1} parent=11 // pred_region
          _
        $region28: #{tpu_custom_call.1} parent=11 // pred_fallthru
          _
      $region12: #{tpu_custom_call.1} parent=5 // pred_fallthru
        _
      %p201 = scmp.lt.s32.totalorder %s18, 2
      // Predicated region
      $region29: #{tpu_custom_call.1} parent=5 // pred_check
        %p202 = pneg %p201
      $region30: #{tpu_custom_call.1} parent=5 // pred_check_branch
        %204 = sbr.rel (%p202) target = $region32
      $region31: #{tpu_custom_call.1} parent=5 // pred_region
        // Predicated region
        $region33: #{tpu_custom_call.1} parent=31 // pred_check
          %p205 = pneg %p38
        $region34: #{tpu_custom_call.1} parent=31 // pred_check_branch
          %207 = sbr.rel (%p205) target = $region36
        $region35: #{tpu_custom_call.1} parent=31 // pred_region
          %s208 = sand.u32 %s28, 1
          %s209 = scalar_lea.sflag [#allocation5], %s208
          %s210 = sand.u32 %s28, 1
          %s211 = smul.addr %s210, 8
          %s212 = scalar_lea.vmem [#allocation4], %s211
          %s214 = ssub.s32 128, 128
          %215 = vsyncadd %s209, %s214
          %s216 = smul.addr %s18, 128
          %s217 = scalar_lea.hbm %s0, %s216
          %s219 = sshll.u32 %s212, 4
          %s220 = int_to_ptr.vmem [resolvable:$true] %s219
          %222 = dma.hbm_to_vmem [thread:$0]  %s217, 128, %s220, %s209
        $region36: #{tpu_custom_call.1} parent=31 // pred_fallthru
          _
      $region32: #{tpu_custom_call.1} parent=5 // pred_fallthru
        _
      %p223 = scmp.le.s32.totalorder 1, %s18
      %p224 = scmp.lt.s32.totalorder %s18, 3
      %p225 = pnand %p223, %p224
      %p226 = pneg %p225
      // Predicated region
      $region37: #{tpu_custom_call.1} parent=5 // pred_check
        _
      $region38: #{tpu_custom_call.1} parent=5 // pred_check_branch
        %228 = sbr.rel (%p225) target = $region40
      $region39: #{tpu_custom_call.1} parent=5 // pred_region
        %s229 = ssub.s32 %s18, 1
        %s230 = sand.u32 %s31, 1
        %s231 = scalar_lea.sflag [#allocation5], %s230
        %s232 = sand.u32 %s31, 1
        %s233 = smul.addr %s232, 8
        %s234 = scalar_lea.vmem [#allocation4], %s233
        // Predicated region
        $region41: #{tpu_custom_call.1} parent=39 // pred_check
          %p235 = pneg %p44
        $region42: #{tpu_custom_call.1} parent=39 // pred_check_branch
          %237 = sbr.rel (%p235) target = $region44
        $region43: #{tpu_custom_call.1} parent=39 // pred_region
          %238 = dma.done %s231, 128
        $region44: #{tpu_custom_call.1} parent=39 // pred_fallthru
          _
        // Predicated region
        $region45: #{tpu_custom_call.1} parent=39 // pred_check
          %p239 = pneg %p65
        $region46: #{tpu_custom_call.1} parent=39 // pred_check_branch
          %241 = sbr.rel (%p239) target = $region48
        $region47: #{tpu_custom_call.1} parent=39 // pred_region
          %242 = dma.done [#allocation8], 256
        $region48: #{tpu_custom_call.1} parent=39 // pred_fallthru
          _
        // Predicated region
        $region49: #{tpu_custom_call.1} parent=39 // pred_check
          %p243 = pneg %p107
        $region50: #{tpu_custom_call.1} parent=39 // pred_check_branch
          %245 = sbr.rel (%p243) target = $region52
        $region51: #{tpu_custom_call.1} parent=39 // pred_region
          %246 = dma.done [#allocation8], 256
        $region52: #{tpu_custom_call.1} parent=39 // pred_fallthru
          _
        %s247 = sand.u32 %s31, 1
        %s248 = scalar_lea.sflag [#allocation5], %s247
        %s249 = sand.u32 %s31, 1
        %s250 = smul.addr %s249, 8
        %s251 = scalar_lea.vmem [#allocation4], %s250
        %p252 = pneg %p44
        %p253 = pneg %p41
        %p254 = pneg %p65
        %p255 = pneg %p62
        %p256 = pneg %p86
        %p257 = pneg %p83
        %p258 = pneg %p107
        %p259 = pneg %p104
        %p260 = pneg %p128
        %p261 = pneg %p125
        %p262 = pneg %p154
        %p263 = pneg %p151
        %s264 = sand.u32 %s141, 1
        %s265 = scalar_lea.sflag [#allocation6], %s264
        %s266 = sand.u32 %s141, 1
        %s267 = smul.addr %s266, 8
        %s268 = scalar_lea.vmem [#allocation10], %s267
        %v270 = vld [vmem:[%s234] sm:$0xff]
        %v271 = vpack.c.bf16 %v270, %v270
        %v272 = vld [vmem:[#allocation7] sm:$0xf]
        %v273 = vld [vmem:[#allocation7 + $0x4] sm:$0xf]
        %v274 = vld [vmem:[#allocation7 + $0x8] sm:$0xf]
        %v275 = vld [vmem:[#allocation7 + $0xc] sm:$0xf]
        %v276 = vld [vmem:[%s2] sm:$0x1]
        %v278 = vlaneseq
        %v279 = vshrl.u32 %v278, 7
        %v280 = vsub.s32 0, %v279
        %v281 = vrot.slane %v276, %v280
        %v287 = vunpack.c.l.b16 %v272
        %v288 = vunpack.c.l.b16 %v273
        %v289 = vunpack.c.l.b16 %v274
        %v290 = vunpack.c.l.b16 %v275
        %v291 = vpack.c.b16 %v288, %v287
        %v292 = vpack.c.b16 %v290, %v289
        %vm295 = vcmask 261120
        %v297 = vsel %vm295, %v271, 0
        %299 = vmatprep.subr.bf16.mxu0 0
        %300 = vmatpush1.bf16.msra.mxu0 %v291
        %301 = vmatprep.subr.bf16.mxu0 0
        %302 = vmatpush1.bf16.msra.mxu0 %v292
        %303 = vmatprep.subr.bf16.mxu0 0
        %304 = vmatpush1.bf16.msra.mxu0 0
        %305 = vmatprep.subr.bf16.mxu0 0
        %306 = vmatpush1.bf16.msra.mxu0 0
        %307 = vmatprep.subr.bf16.mxu0 0
        %308 = vmatpush1.bf16.msra.mxu0 0
        %309 = vmatprep.subr.bf16.mxu0 0
        %310 = vmatpush1.bf16.msra.mxu0 0
        %311 = vmatprep.subr.bf16.mxu0 0
        %312 = vmatpush1.bf16.msra.mxu0 0
        %313 = vmatprep.subr.bf16.mxu0 0
        %314 = vmatpush1.bf16.msra.mxu0 0
        %315 = vmatprep.subr.bf16.mxu0 0
        %316 = vmatpush1.bf16.msra.mxu0 0
        %317 = vmatprep.subr.bf16.mxu0 0
        %318 = vmatpush1.bf16.msra.mxu0 0
        %319 = vmatprep.subr.bf16.mxu0 0
        %320 = vmatpush1.bf16.msra.mxu0 0
        %321 = vmatprep.subr.bf16.mxu0 0
        %322 = vmatpush1.bf16.msra.mxu0 0
        %323 = vmatprep.subr.bf16.mxu0 0
        %324 = vmatpush1.bf16.msra.mxu0 0
        %325 = vmatprep.subr.bf16.mxu0 0
        %326 = vmatpush1.bf16.msra.mxu0 0
        %327 = vmatprep.subr.bf16.mxu0 0
        %328 = vmatpush1.bf16.msra.mxu0 0
        %329 = vmatprep.subr.bf16.mxu0 0
        %330 = vmatpush1.bf16.msra.mxu0 0
        %331 = vmatprep.mubr.bf16.mxu0 0
        %332 = vmatmul.mubr.bf16.gmra.mrb[0].mxu0 %v297
        %v333 = vpop.f32.mrb[0].mxu0
        %v334 = vadd.f32 %v281, %v333
        %v335 = vpop.f32.mrb[0].mxu0
        %v336 = vpop.f32.mrb[0].mxu0
        %v337 = vpop.f32.mrb[0].mxu0
        %338 = vdwg.mxu0
        %v339 = vpack.c.bf16 %v334, %v334
        %vm340 = vcmask 781312
        %341 = vst.msk [vmem:[#allocation2] sm:$0xf] %vm340, %v339
        %v342 = vld [vmem:[#allocation2] sm:$0xf]
        %v344 = vunpack.c.l.b16 %v342
        %v345 = vpack.c.b16 %v344, %v344
        %346 = vrot.lane.b32.xlu0 %v345, 96
        %v347 = vpop.permute.xlu0 %346
        %vm348 = vcmask 64512
        %v350 = vsel %vm348, %v342, 0
        %v353 = vsel %vm348, %v347, 0
        %355 = vmatprep.subr.bf16.mxu0 0
        %356 = vmatpush1.bf16.xpose.msra.mxu0 %v353
        %357 = vmatprep.subr.bf16.mxu0 0
        %358 = vmatpush1.bf16.xpose.msra.mxu0 0
        %359 = vmatprep.subr.bf16.mxu0 0
        %360 = vmatpush1.bf16.xpose.msra.mxu0 0
        %361 = vmatprep.subr.bf16.mxu0 0
        %362 = vmatpush1.bf16.xpose.msra.mxu0 0
        %363 = vmatprep.subr.bf16.mxu0 0
        %364 = vmatpush1.bf16.xpose.msra.mxu0 0
        %365 = vmatprep.subr.bf16.mxu0 0
        %366 = vmatpush1.bf16.xpose.msra.mxu0 0
        %367 = vmatprep.subr.bf16.mxu0 0
        %368 = vmatpush1.bf16.xpose.msra.mxu0 0
        %369 = vmatprep.subr.bf16.mxu0 0
        %370 = vmatpush1.bf16.xpose.msra.mxu0 0
        %371 = vmatprep.subr.bf16.mxu0 0
        %372 = vmatpush1.bf16.xpose.msra.mxu0 0
        %373 = vmatprep.subr.bf16.mxu0 0
        %374 = vmatpush1.bf16.xpose.msra.mxu0 0
        %375 = vmatprep.subr.bf16.mxu0 0
        %376 = vmatpush1.bf16.xpose.msra.mxu0 0
        %377 = vmatprep.subr.bf16.mxu0 0
        %378 = vmatpush1.bf16.xpose.msra.mxu0 0
        %379 = vmatprep.subr.bf16.mxu0 0
        %380 = vmatpush1.bf16.xpose.msra.mxu0 0
        %381 = vmatprep.subr.bf16.mxu0 0
        %382 = vmatpush1.bf16.xpose.msra.mxu0 0
        %383 = vmatprep.subr.bf16.mxu0 0
        %384 = vmatpush1.bf16.xpose.msra.mxu0 0
        %385 = vmatprep.subr.bf16.mxu0 0
        %386 = vmatpush1.bf16.xpose.msra.mxu0 0
        %387 = vmatprep.mubr.bf16.mxu0 0
        %388 = vmatmul.mubr.bf16.gmra.mrb[0].mxu0 %v350
        %v389 = vpop.f32.mrb[0].mxu0
        %v390 = vadd.f32 0.0, %v389
        %v391 = vpop.f32.mrb[0].mxu0
        %v392 = vpop.f32.mrb[0].mxu0
        %v393 = vpop.f32.mrb[0].mxu0
        %394 = vdwg.mxu0
        %v395 = vsel %vm348, %v390, -inf
        %396 = vmax.xlane.f32.xlu0 %v395
        %v397 = vpop.xlane.xlu0 %396
        %v398 = vsub.f32 %v390, %v397
        %v399 = vmul.f32 %v398, 1.442695
        %v400 = vpow.pop %v399
        %v401 = vsel %vm348, %v400, 0.0
        %402 = vadd.xlane.f32.xlu0 %v401
        %v403 = vpop.xlane.xlu0 %402
        %v404 = vrcp.pop %v403
        %v405 = vmul.f32 %v400, %v404
        %v406 = vpack.c.bf16 %v405, %v405
        %407 = vrot.lane.b32.xlu0 %v345, 64
        %v408 = vpop.permute.xlu0 %407
        %v410 = vsel %vm348, %v406, 0
        %vm412 = vcmask 1043456
        %v414 = vsel %vm412, %v408, 0
        %416 = vmatprep.subr.bf16.mxu0 0
        %417 = vmatpush1.bf16.msra.mxu0 %v414
        %418 = vmatprep.subr.bf16.mxu0 0
        %419 = vmatpush1.bf16.msra.mxu0 0
        %420 = vmatprep.subr.bf16.mxu0 0
        %421 = vmatpush1.bf16.msra.mxu0 0
        %422 = vmatprep.subr.bf16.mxu0 0
        %423 = vmatpush1.bf16.msra.mxu0 0
        %424 = vmatprep.subr.bf16.mxu0 0
        %425 = vmatpush1.bf16.msra.mxu0 0
        %426 = vmatprep.subr.bf16.mxu0 0
        %427 = vmatpush1.bf16.msra.mxu0 0
        %428 = vmatprep.subr.bf16.mxu0 0
        %429 = vmatpush1.bf16.msra.mxu0 0
        %430 = vmatprep.subr.bf16.mxu0 0
        %431 = vmatpush1.bf16.msra.mxu0 0
        %432 = vmatprep.subr.bf16.mxu0 0
        %433 = vmatpush1.bf16.msra.mxu0 0
        %434 = vmatprep.subr.bf16.mxu0 0
        %435 = vmatpush1.bf16.msra.mxu0 0
        %436 = vmatprep.subr.bf16.mxu0 0
        %437 = vmatpush1.bf16.msra.mxu0 0
        %438 = vmatprep.subr.bf16.mxu0 0
        %439 = vmatpush1.bf16.msra.mxu0 0
        %440 = vmatprep.subr.bf16.mxu0 0
        %441 = vmatpush1.bf16.msra.mxu0 0
        %442 = vmatprep.subr.bf16.mxu0 0
        %443 = vmatpush1.bf16.msra.mxu0 0
        %444 = vmatprep.subr.bf16.mxu0 0
        %445 = vmatpush1.bf16.msra.mxu0 0
        %446 = vmatprep.subr.bf16.mxu0 0
        %447 = vmatpush1.bf16.msra.mxu0 0
        %448 = vmatprep.mubr.bf16.mxu0 0
        %449 = vmatmul.mubr.bf16.gmra.mrb[0].mxu0 %v410
        %v450 = vpop.f32.mrb[0].mxu0
        %v451 = vadd.f32 0.0, %v450
        %v452 = vpop.f32.mrb[0].mxu0
        %v453 = vpop.f32.mrb[0].mxu0
        %v454 = vpop.f32.mrb[0].mxu0
        %455 = vdwg.mxu0
        %v456 = vpack.c.bf16 %v451, %v451
        %vm457 = vcmask 60416
        %458 = vst.msk [vmem:[#allocation3] sm:$0xf] %vm457, %v456
        %v459 = vld [vmem:[#allocation2] sm:$0xf]
        %v461 = vunpack.c.l.b16 %v459
        %v462 = vpack.c.b16 %v461, %v461
        %463 = vrot.lane.b32.xlu0 %v462, 120
        %v464 = vpop.permute.xlu0 %463
        %465 = vrot.lane.b32.xlu0 %v462, 88
        %v466 = vpop.permute.xlu0 %465
        %v468 = vsel %vm348, %v464, 0
        %v471 = vsel %vm348, %v466, 0
        %473 = vmatprep.subr.bf16.mxu0 0
        %474 = vmatpush1.bf16.xpose.msra.mxu0 %v471
        %475 = vmatprep.subr.bf16.mxu0 0
        %476 = vmatpush1.bf16.xpose.msra.mxu0 0
        %477 = vmatprep.subr.bf16.mxu0 0
        %478 = vmatpush1.bf16.xpose.msra.mxu0 0
        %479 = vmatprep.subr.bf16.mxu0 0
        %480 = vmatpush1.bf16.xpose.msra.mxu0 0
        %481 = vmatprep.subr.bf16.mxu0 0
        %482 = vmatpush1.bf16.xpose.msra.mxu0 0
        %483 = vmatprep.subr.bf16.mxu0 0
        %484 = vmatpush1.bf16.xpose.msra.mxu0 0
        %485 = vmatprep.subr.bf16.mxu0 0
        %486 = vmatpush1.bf16.xpose.msra.mxu0 0
        %487 = vmatprep.subr.bf16.mxu0 0
        %488 = vmatpush1.bf16.xpose.msra.mxu0 0
        %489 = vmatprep.subr.bf16.mxu0 0
        %490 = vmatpush1.bf16.xpose.msra.mxu0 0
        %491 = vmatprep.subr.bf16.mxu0 0
        %492 = vmatpush1.bf16.xpose.msra.mxu0 0
        %493 = vmatprep.subr.bf16.mxu0 0
        %494 = vmatpush1.bf16.xpose.msra.mxu0 0
        %495 = vmatprep.subr.bf16.mxu0 0
        %496 = vmatpush1.bf16.xpose.msra.mxu0 0
        %497 = vmatprep.subr.bf16.mxu0 0
        %498 = vmatpush1.bf16.xpose.msra.mxu0 0
        %499 = vmatprep.subr.bf16.mxu0 0
        %500 = vmatpush1.bf16.xpose.msra.mxu0 0
        %501 = vmatprep.subr.bf16.mxu0 0
        %502 = vmatpush1.bf16.xpose.msra.mxu0 0
        %503 = vmatprep.subr.bf16.mxu0 0
        %504 = vmatpush1.bf16.xpose.msra.mxu0 0
        %505 = vmatprep.mubr.bf16.mxu0 0
        %506 = vmatmul.mubr.bf16.gmra.mrb[0].mxu0 %v468
        %v507 = vpop.f32.mrb[0].mxu0
        %v508 = vadd.f32 0.0, %v507
        %v509 = vpop.f32.mrb[0].mxu0
        %v510 = vpop.f32.mrb[0].mxu0
        %v511 = vpop.f32.mrb[0].mxu0
        %512 = vdwg.mxu0
        %v513 = vsel %vm348, %v508, -inf
        %514 = vmax.xlane.f32.xlu0 %v513
        %v515 = vpop.xlane.xlu0 %514
        %v516 = vsub.f32 %v508, %v515
        %v517 = vmul.f32 %v516, 1.442695
        %v518 = vpow.pop %v517
        %v519 = vsel %vm348, %v518, 0.0
        %520 = vadd.xlane.f32.xlu0 %v519
        %v521 = vpop.xlane.xlu0 %520
        %v522 = vrcp.pop %v521
        %v523 = vmul.f32 %v518, %v522
        %v524 = vpack.c.bf16 %v523, %v523
        %525 = vrot.lane.b32.xlu0 %v462, 56
        %v526 = vpop.permute.xlu0 %525
        %v528 = vsel %vm348, %v524, 0
        %v531 = vsel %vm412, %v526, 0
        %533 = vmatprep.subr.bf16.mxu0 0
        %534 = vmatpush1.bf16.msra.mxu0 %v531
        %535 = vmatprep.subr.bf16.mxu0 0
        %536 = vmatpush1.bf16.msra.mxu0 0
        %537 = vmatprep.subr.bf16.mxu0 0
        %538 = vmatpush1.bf16.msra.mxu0 0
        %539 = vmatprep.subr.bf16.mxu0 0
        %540 = vmatpush1.bf16.msra.mxu0 0
        %541 = vmatprep.subr.bf16.mxu0 0
        %542 = vmatpush1.bf16.msra.mxu0 0
        %543 = vmatprep.subr.bf16.mxu0 0
        %544 = vmatpush1.bf16.msra.mxu0 0
        %545 = vmatprep.subr.bf16.mxu0 0
        %546 = vmatpush1.bf16.msra.mxu0 0
        %547 = vmatprep.subr.bf16.mxu0 0
        %548 = vmatpush1.bf16.msra.mxu0 0
        %549 = vmatprep.subr.bf16.mxu0 0
        %550 = vmatpush1.bf16.msra.mxu0 0
        %551 = vmatprep.subr.bf16.mxu0 0
        %552 = vmatpush1.bf16.msra.mxu0 0
        %553 = vmatprep.subr.bf16.mxu0 0
        %554 = vmatpush1.bf16.msra.mxu0 0
        %555 = vmatprep.subr.bf16.mxu0 0
        %556 = vmatpush1.bf16.msra.mxu0 0
        %557 = vmatprep.subr.bf16.mxu0 0
        %558 = vmatpush1.bf16.msra.mxu0 0
        %559 = vmatprep.subr.bf16.mxu0 0
        %560 = vmatpush1.bf16.msra.mxu0 0
        %561 = vmatprep.subr.bf16.mxu0 0
        %562 = vmatpush1.bf16.msra.mxu0 0
        %563 = vmatprep.subr.bf16.mxu0 0
        %564 = vmatpush1.bf16.msra.mxu0 0
        %565 = vmatprep.mubr.bf16.mxu0 0
        %566 = vmatmul.mubr.bf16.gmra.mrb[0].mxu0 %v528
        %v567 = vpop.f32.mrb[0].mxu0
        %v568 = vadd.f32 0.0, %v567
        %v569 = vpop.f32.mrb[0].mxu0
        %v570 = vpop.f32.mrb[0].mxu0
        %v571 = vpop.f32.mrb[0].mxu0
        %572 = vdwg.mxu0
        %v573 = vpack.c.bf16 %v568, %v568
        %v575 = vunpack.c.l.b16 %v573
        %v576 = vpack.c.b16 %v575, %v575
        %577 = vrot.lane.b32.xlu0 %v576, 8
        %v578 = vpop.permute.xlu0 %577
        %vm580 = vcmask 126016
        %581 = vst.msk [vmem:[#allocation3] sm:$0xf] %vm580, %v578
        %v582 = vld [vmem:[#allocation2] sm:$0xf]
        %v584 = vunpack.c.l.b16 %v582
        %v585 = vpack.c.b16 %v584, %v584
        %586 = vrot.lane.b32.xlu0 %v585, 112
        %v587 = vpop.permute.xlu0 %586
        %588 = vrot.lane.b32.xlu0 %v585, 80
        %v589 = vpop.permute.xlu0 %588
        %v591 = vsel %vm348, %v587, 0
        %v594 = vsel %vm348, %v589, 0
        %596 = vmatprep.subr.bf16.mxu0 0
        %597 = vmatpush1.bf16.xpose.msra.mxu0 %v594
        %598 = vmatprep.subr.bf16.mxu0 0
        %599 = vmatpush1.bf16.xpose.msra.mxu0 0
        %600 = vmatprep.subr.bf16.mxu0 0
        %601 = vmatpush1.bf16.xpose.msra.mxu0 0
        %602 = vmatprep.subr.bf16.mxu0 0
        %603 = vmatpush1.bf16.xpose.msra.mxu0 0
        %604 = vmatprep.subr.bf16.mxu0 0
        %605 = vmatpush1.bf16.xpose.msra.mxu0 0
        %606 = vmatprep.subr.bf16.mxu0 0
        %607 = vmatpush1.bf16.xpose.msra.mxu0 0
        %608 = vmatprep.subr.bf16.mxu0 0
        %609 = vmatpush1.bf16.xpose.msra.mxu0 0
        %610 = vmatprep.subr.bf16.mxu0 0
        %611 = vmatpush1.bf16.xpose.msra.mxu0 0
        %612 = vmatprep.subr.bf16.mxu0 0
        %613 = vmatpush1.bf16.xpose.msra.mxu0 0
        %614 = vmatprep.subr.bf16.mxu0 0
        %615 = vmatpush1.bf16.xpose.msra.mxu0 0
        %616 = vmatprep.subr.bf16.mxu0 0
        %617 = vmatpush1.bf16.xpose.msra.mxu0 0
        %618 = vmatprep.subr.bf16.mxu0 0
        %619 = vmatpush1.bf16.xpose.msra.mxu0 0
        %620 = vmatprep.subr.bf16.mxu0 0
        %621 = vmatpush1.bf16.xpose.msra.mxu0 0
        %622 = vmatprep.subr.bf16.mxu0 0
        %623 = vmatpush1.bf16.xpose.msra.mxu0 0
        %624 = vmatprep.subr.bf16.mxu0 0
        %625 = vmatpush1.bf16.xpose.msra.mxu0 0
        %626 = vmatprep.subr.bf16.mxu0 0
        %627 = vmatpush1.bf16.xpose.msra.mxu0 0
        %628 = vmatprep.mubr.bf16.mxu0 0
        %629 = vmatmul.mubr.bf16.gmra.mrb[0].mxu0 %v591
        %v630 = vpop.f32.mrb[0].mxu0
        %v631 = vadd.f32 0.0, %v630
        %v632 = vpop.f32.mrb[0].mxu0
        %v633 = vpop.f32.mrb[0].mxu0
        %v634 = vpop.f32.mrb[0].mxu0
        %635 = vdwg.mxu0
        %v636 = vsel %vm348, %v631, -inf
        %637 = vmax.xlane.f32.xlu0 %v636
        %v638 = vpop.xlane.xlu0 %637
        %v639 = vsub.f32 %v631, %v638
        %v640 = vmul.f32 %v639, 1.442695
        %v641 = vpow.pop %v640
        %v642 = vsel %vm348, %v641, 0.0
        %643 = vadd.xlane.f32.xlu0 %v642
        %v644 = vpop.xlane.xlu0 %643
        %v645 = vrcp.pop %v644
        %v646 = vmul.f32 %v641, %v645
        %v647 = vpack.c.bf16 %v646, %v646
        %648 = vrot.lane.b32.xlu0 %v585, 48
        %v649 = vpop.permute.xlu0 %648
        %v651 = vsel %vm348, %v647, 0
        %v654 = vsel %vm412, %v649, 0
        %656 = vmatprep.subr.bf16.mxu0 0
        %657 = vmatpush1.bf16.msra.mxu0 %v654
        %658 = vmatprep.subr.bf16.mxu0 0
        %659 = vmatpush1.bf16.msra.mxu0 0
        %660 = vmatprep.subr.bf16.mxu0 0
        %661 = vmatpush1.bf16.msra.mxu0 0
        %662 = vmatprep.subr.bf16.mxu0 0
        %663 = vmatpush1.bf16.msra.mxu0 0
        %664 = vmatprep.subr.bf16.mxu0 0
        %665 = vmatpush1.bf16.msra.mxu0 0
        %666 = vmatprep.subr.bf16.mxu0 0
        %667 = vmatpush1.bf16.msra.mxu0 0
        %668 = vmatprep.subr.bf16.mxu0 0
        %669 = vmatpush1.bf16.msra.mxu0 0
        %670 = vmatprep.subr.bf16.mxu0 0
        %671 = vmatpush1.bf16.msra.mxu0 0
        %672 = vmatprep.subr.bf16.mxu0 0
        %673 = vmatpush1.bf16.msra.mxu0 0
        %674 = vmatprep.subr.bf16.mxu0 0
        %675 = vmatpush1.bf16.msra.mxu0 0
        %676 = vmatprep.subr.bf16.mxu0 0
        %677 = vmatpush1.bf16.msra.mxu0 0
        %678 = vmatprep.subr.bf16.mxu0 0
        %679 = vmatpush1.bf16.msra.mxu0 0
        %680 = vmatprep.subr.bf16.mxu0 0
        %681 = vmatpush1.bf16.msra.mxu0 0
        %682 = vmatprep.subr.bf16.mxu0 0
        %683 = vmatpush1.bf16.msra.mxu0 0
        %684 = vmatprep.subr.bf16.mxu0 0
        %685 = vmatpush1.bf16.msra.mxu0 0
        %686 = vmatprep.subr.bf16.mxu0 0
        %687 = vmatpush1.bf16.msra.mxu0 0
        %688 = vmatprep.mubr.bf16.mxu0 0
        %689 = vmatmul.mubr.bf16.gmra.mrb[0].mxu0 %v651
        %v690 = vpop.f32.mrb[0].mxu0
        %v691 = vadd.f32 0.0, %v690
        %v692 = vpop.f32.mrb[0].mxu0
        %v693 = vpop.f32.mrb[0].mxu0
        %v694 = vpop.f32.mrb[0].mxu0
        %695 = vdwg.mxu0
        %v696 = vpack.c.bf16 %v691, %v691
        %v698 = vunpack.c.l.b16 %v696
        %v699 = vpack.c.b16 %v698, %v698
        %700 = vrot.lane.b32.xlu0 %v699, 16
        %v701 = vpop.permute.xlu0 %700
        %vm703 = vcmask 191616
        %704 = vst.msk [vmem:[#allocation3] sm:$0xf] %vm703, %v701
        %v705 = vld [vmem:[#allocation2] sm:$0xf]
        %v707 = vunpack.c.l.b16 %v705
        %v708 = vpack.c.b16 %v707, %v707
        %709 = vrot.lane.b32.xlu0 %v708, 104
        %v710 = vpop.permute.xlu0 %709
        %711 = vrot.lane.b32.xlu0 %v708, 72
        %v712 = vpop.permute.xlu0 %711
        %v714 = vsel %vm348, %v710, 0
        %v717 = vsel %vm348, %v712, 0
        %719 = vmatprep.subr.bf16.mxu0 0
        %720 = vmatpush1.bf16.xpose.msra.mxu0 %v717
        %721 = vmatprep.subr.bf16.mxu0 0
        %722 = vmatpush1.bf16.xpose.msra.mxu0 0
        %723 = vmatprep.subr.bf16.mxu0 0
        %724 = vmatpush1.bf16.xpose.msra.mxu0 0
        %725 = vmatprep.subr.bf16.mxu0 0
        %726 = vmatpush1.bf16.xpose.msra.mxu0 0
        %727 = vmatprep.subr.bf16.mxu0 0
        %728 = vmatpush1.bf16.xpose.msra.mxu0 0
        %729 = vmatprep.subr.bf16.mxu0 0
        %730 = vmatpush1.bf16.xpose.msra.mxu0 0
        %731 = vmatprep.subr.bf16.mxu0 0
        %732 = vmatpush1.bf16.xpose.msra.mxu0 0
        %733 = vmatprep.subr.bf16.mxu0 0
        %734 = vmatpush1.bf16.xpose.msra.mxu0 0
        %735 = vmatprep.subr.bf16.mxu0 0
        %736 = vmatpush1.bf16.xpose.msra.mxu0 0
        %737 = vmatprep.subr.bf16.mxu0 0
        %738 = vmatpush1.bf16.xpose.msra.mxu0 0
        %739 = vmatprep.subr.bf16.mxu0 0
        %740 = vmatpush1.bf16.xpose.msra.mxu0 0
        %741 = vmatprep.subr.bf16.mxu0 0
        %742 = vmatpush1.bf16.xpose.msra.mxu0 0
        %743 = vmatprep.subr.bf16.mxu0 0
        %744 = vmatpush1.bf16.xpose.msra.mxu0 0
        %745 = vmatprep.subr.bf16.mxu0 0
        %746 = vmatpush1.bf16.xpose.msra.mxu0 0
        %747 = vmatprep.subr.bf16.mxu0 0
        %748 = vmatpush1.bf16.xpose.msra.mxu0 0
        %749 = vmatprep.subr.bf16.mxu0 0
        %750 = vmatpush1.bf16.xpose.msra.mxu0 0
        %751 = vmatprep.mubr.bf16.mxu0 0
        %752 = vmatmul.mubr.bf16.gmra.mrb[0].mxu0 %v714
        %v753 = vpop.f32.mrb[0].mxu0
        %v754 = vadd.f32 0.0, %v753
        %v755 = vpop.f32.mrb[0].mxu0
        %v756 = vpop.f32.mrb[0].mxu0
        %v757 = vpop.f32.mrb[0].mxu0
        %758 = vdwg.mxu0
        %v759 = vsel %vm348, %v754, -inf
        %760 = vmax.xlane.f32.xlu0 %v759
        %v761 = vpop.xlane.xlu0 %760
        %v762 = vsub.f32 %v754, %v761
        %v763 = vmul.f32 %v762, 1.442695
        %v764 = vpow.pop %v763
        %v765 = vsel %vm348, %v764, 0.0
        %766 = vadd.xlane.f32.xlu0 %v765
        %v767 = vpop.xlane.xlu0 %766
        %v768 = vrcp.pop %v767
        %v769 = vmul.f32 %v764, %v768
        %v770 = vpack.c.bf16 %v769, %v769
        %771 = vrot.lane.b32.xlu0 %v708, 40
        %v772 = vpop.permute.xlu0 %771
        %v774 = vsel %vm348, %v770, 0
        %v777 = vsel %vm412, %v772, 0
        %779 = vmatprep.subr.bf16.mxu0 0
        %780 = vmatpush1.bf16.msra.mxu0 %v777
        %781 = vmatprep.subr.bf16.mxu0 0
        %782 = vmatpush1.bf16.msra.mxu0 0
        %783 = vmatprep.subr.bf16.mxu0 0
        %784 = vmatpush1.bf16.msra.mxu0 0
        %785 = vmatprep.subr.bf16.mxu0 0
        %786 = vmatpush1.bf16.msra.mxu0 0
        %787 = vmatprep.subr.bf16.mxu0 0
        %788 = vmatpush1.bf16.msra.mxu0 0
        %789 = vmatprep.subr.bf16.mxu0 0
        %790 = vmatpush1.bf16.msra.mxu0 0
        %791 = vmatprep.subr.bf16.mxu0 0
        %792 = vmatpush1.bf16.msra.mxu0 0
        %793 = vmatprep.subr.bf16.mxu0 0
        %794 = vmatpush1.bf16.msra.mxu0 0
        %795 = vmatprep.subr.bf16.mxu0 0
        %796 = vmatpush1.bf16.msra.mxu0 0
        %797 = vmatprep.subr.bf16.mxu0 0
        %798 = vmatpush1.bf16.msra.mxu0 0
        %799 = vmatprep.subr.bf16.mxu0 0
        %800 = vmatpush1.bf16.msra.mxu0 0
        %801 = vmatprep.subr.bf16.mxu0 0
        %802 = vmatpush1.bf16.msra.mxu0 0
        %803 = vmatprep.subr.bf16.mxu0 0
        %804 = vmatpush1.bf16.msra.mxu0 0
        %805 = vmatprep.subr.bf16.mxu0 0
        %806 = vmatpush1.bf16.msra.mxu0 0
        %807 = vmatprep.subr.bf16.mxu0 0
        %808 = vmatpush1.bf16.msra.mxu0 0
        %809 = vmatprep.subr.bf16.mxu0 0
        %810 = vmatpush1.bf16.msra.mxu0 0
        %811 = vmatprep.mubr.bf16.mxu0 0
        %812 = vmatmul.mubr.bf16.gmra.mrb[0].mxu0 %v774
        %v813 = vpop.f32.mrb[0].mxu0
        %v814 = vadd.f32 0.0, %v813
        %v815 = vpop.f32.mrb[0].mxu0
        %v816 = vpop.f32.mrb[0].mxu0
        %v817 = vpop.f32.mrb[0].mxu0
        %818 = vdwg.mxu0
        %v819 = vpack.c.bf16 %v814, %v814
        %v821 = vunpack.c.l.b16 %v819
        %v822 = vpack.c.b16 %v821, %v821
        %823 = vrot.lane.b32.xlu0 %v822, 24
        %v824 = vpop.permute.xlu0 %823
        %vm826 = vcmask 257216
        %827 = vst.msk [vmem:[#allocation3] sm:$0xf] %vm826, %v824
        %v828 = vld [vmem:[%s4] sm:$0x1]
        %v829 = vld [vmem:[%s4 + $0x1] sm:$0x1]
        %v830 = vld [vmem:[%s4 + $0x2] sm:$0x1]
        %v831 = vld [vmem:[#allocation3] sm:$0xf]
        %v832 = vld [vmem:[#allocation9] sm:$0xf]
        %v833 = vld [vmem:[#allocation9 + $0x4] sm:$0xf]
        %v834 = vld [vmem:[#allocation9 + $0x8] sm:$0xf]
        %v835 = vld [vmem:[#allocation9 + $0xc] sm:$0xf]
        %v836 = vlaneseq
        %v837 = vshrl.u32 %v836, 7
        %v838 = vsub.s32 0, %v837
        %v839 = vrot.slane %v828, %v838
        %v844 = vunpack.c.l.b16 %v832
        %v845 = vunpack.c.l.b16 %v833
        %v846 = vunpack.c.l.b16 %v834
        %v847 = vunpack.c.l.b16 %v835
        %v848 = vpack.c.b16 %v845, %v844
        %v849 = vpack.c.b16 %v847, %v846
        %v853 = vsel %vm295, %v831, 0
        %855 = vmatprep.subr.bf16.mxu0 0
        %856 = vmatpush1.bf16.msra.mxu0 %v848
        %857 = vmatprep.subr.bf16.mxu0 0
        %858 = vmatpush1.bf16.msra.mxu0 %v849
        %859 = vmatprep.subr.bf16.mxu0 0
        %860 = vmatpush1.bf16.msra.mxu0 0
        %861 = vmatprep.subr.bf16.mxu0 0
        %862 = vmatpush1.bf16.msra.mxu0 0
        %863 = vmatprep.subr.bf16.mxu0 0
        %864 = vmatpush1.bf16.msra.mxu0 0
        %865 = vmatprep.subr.bf16.mxu0 0
        %866 = vmatpush1.bf16.msra.mxu0 0
        %867 = vmatprep.subr.bf16.mxu0 0
        %868 = vmatpush1.bf16.msra.mxu0 0
        %869 = vmatprep.subr.bf16.mxu0 0
        %870 = vmatpush1.bf16.msra.mxu0 0
        %871 = vmatprep.subr.bf16.mxu0 0
        %872 = vmatpush1.bf16.msra.mxu0 0
        %873 = vmatprep.subr.bf16.mxu0 0
        %874 = vmatpush1.bf16.msra.mxu0 0
        %875 = vmatprep.subr.bf16.mxu0 0
        %876 = vmatpush1.bf16.msra.mxu0 0
        %877 = vmatprep.subr.bf16.mxu0 0
        %878 = vmatpush1.bf16.msra.mxu0 0
        %879 = vmatprep.subr.bf16.mxu0 0
        %880 = vmatpush1.bf16.msra.mxu0 0
        %881 = vmatprep.subr.bf16.mxu0 0
        %882 = vmatpush1.bf16.msra.mxu0 0
        %883 = vmatprep.subr.bf16.mxu0 0
        %884 = vmatpush1.bf16.msra.mxu0 0
        %885 = vmatprep.subr.bf16.mxu0 0
        %886 = vmatpush1.bf16.msra.mxu0 0
        %887 = vmatprep.mubr.bf16.mxu0 0
        %888 = vmatmul.mubr.bf16.gmra.mrb[0].mxu0 %v853
        %v889 = vpop.f32.mrb[0].mxu0
        %v890 = vadd.f32 %v839, %v889
        %v891 = vpop.f32.mrb[0].mxu0
        %v892 = vpop.f32.mrb[0].mxu0
        %v893 = vpop.f32.mrb[0].mxu0
        %894 = vdwg.mxu0
        %v895 = vadd.f32 %v270, %v890
        %v896 = vsel %vm295, %v895, 0.0
        %897 = vadd.xlane.f32.xlu0 %v896
        %v898 = vpop.xlane.xlu0 %897
        %v899 = vrcp.pop 32.0
        %v900 = vmul.f32 %v898, %v899
        %v901 = vsub.f32 %v895, %v900
        %v902 = vmul.f32 %v901, %v901
        %v903 = vsel %vm295, %v902, 0.0
        %904 = vadd.xlane.f32.xlu0 %v903
        %v905 = vpop.xlane.xlu0 %904
        %v906 = vmul.f32 %v905, %v899
        %v907 = vadd.f32 %v906, 1e-05
        %v908 = vrsqrt.pop %v907
        %v909 = vmul.f32 %v901, %v908
        %v910 = vlaneseq
        %v911 = vshrl.u32 %v910, 7
        %v912 = vsub.s32 0, %v911
        %v913 = vrot.slane %v829, %v912
        %v914 = vmul.f32 %v909, %v913
        %v915 = vlaneseq
        %v916 = vshrl.u32 %v915, 7
        %v917 = vsub.s32 0, %v916
        %v918 = vrot.slane %v830, %v917
        %v919 = vadd.f32 %v914, %v918
        %920 = vst.msk [vmem:[%s268] sm:$0xff] %vm295, %v919
        %s921 = sand.u32 %s141, 1
        %s922 = scalar_lea.sflag [#allocation6], %s921
        %s923 = sand.u32 %s141, 1
        %s924 = smul.addr %s923, 8
        %s925 = scalar_lea.vmem [#allocation10], %s924
        // Predicated region
        $region53: #{tpu_custom_call.1} parent=39 // pred_check
          %p926 = pneg %p151
        $region54: #{tpu_custom_call.1} parent=39 // pred_check_branch
          %928 = sbr.rel (%p926) target = $region56
        $region55: #{tpu_custom_call.1} parent=39 // pred_region
          %s930 = ssub.s32 128, 128
          %931 = vsyncadd %s922, %s930
          %s932 = smul.addr %s23, 128
          %s933 = scalar_lea.hbm %s5, %s932
          %s935 = sshll.u32 %s925, 4
          %s936 = int_to_ptr.vmem [resolvable:$true] %s935
          %938 = dma.vmem_to_hbm [thread:$0]  %s936, 128, %s933, %s922
        $region56: #{tpu_custom_call.1} parent=39 // pred_fallthru
          _
      $region40: #{tpu_custom_call.1} parent=5 // pred_fallthru
        _
      %p939 = scmp.le.s32.totalorder 2, %s18
      // Predicated region
      $region57: #{tpu_custom_call.1} parent=5 // pred_check
        %p940 = pneg %p939
      $region58: #{tpu_custom_call.1} parent=5 // pred_check_branch
        %942 = sbr.rel (%p940) target = $region60
      $region59: #{tpu_custom_call.1} parent=5 // pred_region
        %s943 = ssub.s32 %s18, 2
        // Predicated region
        $region61: #{tpu_custom_call.1} parent=59 // pred_check
          %p944 = pneg %p157
        $region62: #{tpu_custom_call.1} parent=59 // pred_check_branch
          %946 = sbr.rel (%p944) target = $region64
        $region63: #{tpu_custom_call.1} parent=59 // pred_region
          %s947 = sand.u32 %s142, 1
          %s948 = scalar_lea.sflag [#allocation6], %s947
          %s949 = sand.u32 %s142, 1
          %s950 = smul.addr %s949, 8
          %s951 = scalar_lea.vmem [#allocation10], %s950
          %952 = dma.done %s948, 128
        $region64: #{tpu_custom_call.1} parent=59 // pred_fallthru
          _
      $region60: #{tpu_custom_call.1} parent=5 // pred_fallthru
        _
    $region6: #{tpu_custom_call.1} parent=1 // loop_footer
      %s22 = sadd.s32 1, %s18
    $region7: #{tpu_custom_call.1} parent=1 // loop_footer_branch
      %17 = sbr.rel target = $region3
    $region8: #{tpu_custom_call.1} parent=1 // loop_exit
      _
    %953 = vsyncpa [#allocation5], 1
    %s954 = scalar_lea.sflag [#allocation5], 1
    %955 = vsyncpa %s954, 1
    %956 = vsyncpa [#allocation8], 1
    %957 = vsyncpa [#allocation6], 1
    %s958 = scalar_lea.sflag [#allocation6], 1
    %959 = vsyncpa %s958, 1

</llo_original>
